<compile_context>
chip_gen: v5e
topology: v5e:2x2
jax: 0.10.0
libtpu: 0.0.40
codegen_flags: <defaults>
</compile_context>

<pallas_src>
import jax
import jax.numpy as jnp
from jax import lax
from jax.experimental import pallas as pl
from jax.experimental.pallas import tpu as pltpu

H_TRUE = 24      # PyTorch hidden size
H_PAD = 32       # padded hidden size -> 4H = 128 lanes (one vreg row)
OUT_PAD = 128    # lane-dense padding for the MLP head / output store


def _ceil_to(x, m):
    return -(-x // m) * m


# ------------------------------------ kernel ------------------------------------

def lstm_model2_kernel(x_ref,                          # (T*Bblk, P)  bf16, time-major per block
                       wih1_ref, whh1_ref, b1_ref,     # (P,4Hp) bf16, (Hp,4Hp) bf16, (1,4Hp) f32
                       wih2_ref, whh2_ref, b2_ref,     # (Hp,4Hp) bf16 x2, (1,4Hp) f32
                       w1_ref, bl1_ref,                # (Hp,128) bf16, (1,128) f32
                       w2_ref, bl2_ref,                # (128,128) bf16, (1,128) f32
                       out_ref):                       # (Bblk, 128) f32
    B = out_ref.shape[0]
    TB = x_ref.shape[0]
    T = TB // B
    Hp = whh1_ref.shape[0]
    G = 4 * Hp
    bf = jnp.bfloat16

    wih1 = wih1_ref[...]
    whh1 = whh1_ref[...]
    wih2 = wih2_ref[...]
    whh2 = whh2_ref[...]

    # Hoisted layer-1 input projection for all timesteps in the block (one MXU op).
    gx1 = jnp.dot(x_ref[...], wih1, preferred_element_type=jnp.float32) + b1_ref[...]

    # Hoisted broadcasts (JAX does not CSE broadcast_in_dim inside the loop).
    b2_b = jnp.broadcast_to(b2_ref[...], (B, G))
    # Per-lane activation: sigmoid(z) = 0.5*tanh(0.5 z) + 0.5 on i/f/o lanes, tanh on g
    # lanes; a single whole-vreg tanh (one EUP push) covers all four gates.
    lane = lax.broadcasted_iota(jnp.int32, (1, G), 1)
    is_g = (lane >= 2 * Hp) & (lane < 3 * Hp)
    scale_b = jnp.broadcast_to(jnp.where(is_g, 1.0, 0.5).astype(jnp.float32), (B, G))
    shift_b = jnp.broadcast_to(jnp.where(is_g, 0.0, 0.5).astype(jnp.float32), (B, G))

    def activate(gates):
        act = scale_b * jnp.tanh(gates * scale_b) + shift_b
        return (act[:, 0 * Hp:1 * Hp], act[:, 1 * Hp:2 * Hp],
                act[:, 2 * Hp:3 * Hp], act[:, 3 * Hp:4 * Hp])

    z = jnp.zeros((B, Hp), jnp.float32)
    h1, c1, h2, c2 = z, z, z, z

    for t in range(T):                                  # fully unrolled (T static, = 8)
        # layer 1: only the recurrent matmul is on the dependent chain.
        g1 = gx1[t * B:(t + 1) * B, :] + jnp.dot(
            h1.astype(bf), whh1, preferred_element_type=jnp.float32)
        i1, f1, gg1, o1 = activate(g1)
        c1 = f1 * c1 + i1 * gg1
        h1 = o1 * jnp.tanh(c1)
        # layer 2: two dots (no lane-axis concat); h2@whh2 depends only on prev h2.
        x2 = jnp.tanh(h1)
        g2 = (jnp.dot(x2.astype(bf), wih2, preferred_element_type=jnp.float32)
              + jnp.dot(h2.astype(bf), whh2, preferred_element_type=jnp.float32)
              + b2_b)
        i2, f2, gg2, o2 = activate(g2)
        c2 = f2 * c2 + i2 * gg2
        h2 = o2 * jnp.tanh(c2)

    # x = tanh(lstm2 out); last time step only -> MLP head (lane-dense, 128 wide).
    feat = jnp.tanh(h2)                                 # (B, Hp); padded lanes stay 0
    y1 = jnp.dot(feat.astype(bf), w1_ref[...],
                 preferred_element_type=jnp.float32) + bl1_ref[...]
    y1 = jnp.maximum(y1, 0.0)
    # TODO(synk): dropout(p=0.5) is identity (inference mode); no in-kernel RNG masking.
    out_ref[...] = jnp.dot(y1.astype(bf), w2_ref[...],
                           preferred_element_type=jnp.float32) + bl2_ref[...]


# ------------------------------ wrapper-side prep ------------------------------

def _pad_gate_cols(w, h, hp):
    """Pad trailing 4*h gate axis to 4*hp, padding each gate block [i,f,g,o]."""
    lead = w.shape[:-1]
    w4 = w.reshape(*lead, 4, h)
    pad = [(0, 0)] * len(lead) + [(0, 0), (0, hp - h)]
    return jnp.pad(w4, pad).reshape(*lead, 4 * hp)


def _pad_rows(w, rows_to):
    return jnp.pad(w, ((0, rows_to - w.shape[0]), (0, 0)))


def _pad_cols(w, cols_to):
    return jnp.pad(w, ((0, 0), (0, cols_to - w.shape[1])))


def prepare_kernel_params(tp, hp=H_PAD):
    """PyTorch-layout params -> transposed / gate-padded / bf16 kernel params."""
    h = H_TRUE
    bf = jnp.bfloat16
    return {
        "wih1": _pad_gate_cols(tp["w_ih1"].T, h, hp).astype(bf),                 # (P, 4Hp)
        "whh1": _pad_rows(_pad_gate_cols(tp["w_hh1"].T, h, hp), hp).astype(bf),  # (Hp, 4Hp)
        "b1": _pad_gate_cols((tp["b_ih1"] + tp["b_hh1"])[None, :], h, hp),       # (1, 4Hp) f32
        "wih2": _pad_rows(_pad_gate_cols(tp["w_ih2"].T, h, hp), hp).astype(bf),  # (Hp, 4Hp)
        "whh2": _pad_rows(_pad_gate_cols(tp["w_hh2"].T, h, hp), hp).astype(bf),  # (Hp, 4Hp)
        "b2": _pad_gate_cols((tp["b_ih2"] + tp["b_hh2"])[None, :], h, hp),       # (1, 4Hp) f32
        "w1": _pad_cols(_pad_rows(tp["w_l1"].T, hp), OUT_PAD).astype(bf),        # (Hp, 128)
        "bl1": _pad_cols(tp["b_l1"][None, :], OUT_PAD),                          # (1, 128) f32
        "w2": _pad_cols(_pad_rows(tp["w_l2"].T, OUT_PAD), OUT_PAD).astype(bf),   # (128, 128)
        "bl2": _pad_cols(tp["b_l2"][None, :], OUT_PAD),                          # (1, 128) f32
    }


def lstm_model2_forward(x, kp, block_batch=128):
    """x: (B, T, P) float32 -> (B, 24, 1) float32 (matches x.view(len(x), -1, 1))."""
    B, T, P = x.shape
    b_blk = _ceil_to(min(block_batch, B), 8)            # batch rows per grid block (mult of 8)
    b_pad = _ceil_to(B, b_blk)
    nblk = b_pad // b_blk

    # (B,T,P) -> time-major rows per block: row (i*T*b_blk + t*b_blk + b) = (batch i*b_blk+b, t)
    x_pad = jnp.pad(x, ((0, b_pad - B), (0, 0), (0, 0)))           # (b_pad, T, P)
    x_blk = x_pad.reshape(nblk, b_blk, T, P).transpose(0, 2, 1, 3)  # (nblk, T, b_blk, P)
    x_flat = x_blk.reshape(nblk * T * b_blk, P).astype(jnp.bfloat16)

    Hp, G = H_PAD, 4 * H_PAD
    flops_blk = (2 * (T * b_blk) * P * G            # hoisted input projection
                 + T * 3 * 2 * b_blk * Hp * G       # 3 recurrent/step dots per step
                 + 2 * b_blk * Hp * OUT_PAD         # linear1
                 + 2 * b_blk * OUT_PAD * OUT_PAD)   # linear2
    trans_blk = T * b_blk * (G + Hp + Hp + G + Hp) + b_blk * Hp
    w_bytes = sum(int(v.nbytes) for v in kp.values())
    bytes_est = int(x_flat.nbytes) + w_bytes + b_pad * OUT_PAD * 4

    full2d = lambda shape: pl.BlockSpec(shape, lambda i: (0, 0))    # weights: resident, all blocks

    out_pad = pl.pallas_call(
        lstm_model2_kernel,
        out_shape=jax.ShapeDtypeStruct((b_pad, OUT_PAD), jnp.float32),
        grid=(nblk,),
        in_specs=[
            pl.BlockSpec((T * b_blk, P), lambda i: (i, 0)),          # x block (time-major)
            full2d(kp["wih1"].shape), full2d(kp["whh1"].shape), full2d(kp["b1"].shape),
            full2d(kp["wih2"].shape), full2d(kp["whh2"].shape), full2d(kp["b2"].shape),
            full2d(kp["w1"].shape), full2d(kp["bl1"].shape),
            full2d(kp["w2"].shape), full2d(kp["bl2"].shape),
        ],
        out_specs=pl.BlockSpec((b_blk, OUT_PAD), lambda i: (i, 0)),
        compiler_params=pltpu.CompilerParams(
            dimension_semantics=("parallel",)),                      # batch blocks -> both TCs (v7x)
        cost_estimate=pl.CostEstimate(
            flops=int(nblk * flops_blk),
            transcendentals=int(nblk * trans_blk),
            bytes_accessed=int(bytes_est)),
    )(x_flat,
      kp["wih1"], kp["whh1"], kp["b1"],
      kp["wih2"], kp["whh2"], kp["b2"],
      kp["w1"], kp["bl1"],
      kp["w2"], kp["bl2"])

    return out_pad[:B, :24].reshape(B, -1, 1)


# ------------------------------ init & reference ------------------------------

def init_torch_params(key, p, hidden=H_TRUE):
    """Deterministic init mirroring PyTorch parameter shapes / gate order [i,f,g,o]."""
    H = hidden
    ks = jax.random.split(key, 12)

    def u(k, shape, bound):
        return jax.random.uniform(k, shape, jnp.float32, -bound, bound)

    bl = 1.0 / jnp.sqrt(jnp.float32(H))
    return {
        "w_ih1": u(ks[0], (4 * H, p), bl), "w_hh1": u(ks[1], (4 * H, H), bl),
        "b_ih1": u(ks[2], (4 * H,), bl),   "b_hh1": u(ks[3], (4 * H,), bl),
        "w_ih2": u(ks[4], (4 * H, H), bl), "w_hh2": u(ks[5], (4 * H, H), bl),
        "b_ih2": u(ks[6], (4 * H,), bl),   "b_hh2": u(ks[7], (4 * H,), bl),
        "w_l1": u(ks[8], (16, H), bl),     "b_l1": u(ks[9], (16,), bl),
        "w_l2": u(ks[10], (H, 16), 1.0 / jnp.sqrt(jnp.float32(16))),
        "b_l2": u(ks[11], (H,), 1.0 / jnp.sqrt(jnp.float32(16))),
    }


def reference_forward(x, tp):
    """Pure-JAX reference matching the PyTorch module (inference mode)."""
    B, T, P = x.shape
    H = H_TRUE

    def cell(x_t, h, c, w_ih, w_hh, b_ih, b_hh):
        gates = x_t @ w_ih.T + h @ w_hh.T + b_ih + b_hh
        i = jax.nn.sigmoid(gates[:, 0:H]); f = jax.nn.sigmoid(gates[:, H:2 * H])
        g = jnp.tanh(gates[:, 2 * H:3 * H]); o = jax.nn.sigmoid(gates[:, 3 * H:4 * H])
        c = f * c + i * g
        return o * jnp.tanh(c), c

    h1 = c1 = h2 = c2 = jnp.zeros((B, H), jnp.float32)
    for t in range(T):
        h1, c1 = cell(x[:, t], h1, c1, tp["w_ih1"], tp["w_hh1"], tp["b_ih1"], tp["b_hh1"])
        h2, c2 = cell(jnp.tanh(h1), h2, c2, tp["w_ih2"], tp["w_hh2"], tp["b_ih2"], tp["b_hh2"])
    feat = jnp.tanh(h2)
    y1 = jnp.maximum(feat @ tp["w_l1"].T + tp["b_l1"], 0.0)
    y2 = y1 @ tp["w_l2"].T + tp["b_l2"]
    return y2.reshape(B, -1, 1)


if __name__ == "__main__":
    key = jax.random.PRNGKey(0)
    k_x, k_p, k_x2 = jax.random.split(key, 3)

    B, T, P = 2, 8, 8             # batch=2, seq=8, n_features p=8
    x = jax.random.normal(k_x, (B, T, P), jnp.float32)

    torch_params = init_torch_params(k_p, P)
    kernel_params = prepare_kernel_params(torch_params)

    out = lstm_model2_forward(x, kernel_params)
    jax.block_until_ready(out)
    assert out.shape == (B, 24, 1), out.shape
    ref = reference_forward(x, torch_params)
    # bf16 single-pass MXU on both kernel and reference -> loose-ish tolerance.
    err = float(jnp.max(jnp.abs(out - ref)))
    assert err < 2e-2, err

    # Exercise the batch-blocked grid path: B=20 with 8-row blocks -> grid=(3,), "parallel".
    B2 = 20
    x2 = jax.random.normal(k_x2, (B2, T, P), jnp.float32)
    out2 = lstm_model2_forward(x2, kernel_params, block_batch=8)
    jax.block_until_ready(out2)
    assert out2.shape == (B2, 24, 1), out2.shape
    ref2 = reference_forward(x2, torch_params)
    err2 = float(jnp.max(jnp.abs(out2 - ref2)))
    assert err2 < 2e-2, err2

    print("KERNEL_OK")
</pallas_src>

<mosaic_0001>
module attributes {stable_mosaic.version = 11 : i64} {
  func.func @lstm_model2_kernel(%arg0: i32, %arg1: memref<64x8xbf16, #tpu.memory_space<vmem>>, %arg2: memref<8x128xbf16, #tpu.memory_space<vmem>>, %arg3: memref<32x128xbf16, #tpu.memory_space<vmem>>, %arg4: memref<1x128xf32, #tpu.memory_space<vmem>>, %arg5: memref<32x128xbf16, #tpu.memory_space<vmem>>, %arg6: memref<32x128xbf16, #tpu.memory_space<vmem>>, %arg7: memref<1x128xf32, #tpu.memory_space<vmem>>, %arg8: memref<32x128xbf16, #tpu.memory_space<vmem>>, %arg9: memref<1x128xf32, #tpu.memory_space<vmem>>, %arg10: memref<128x128xbf16, #tpu.memory_space<vmem>>, %arg11: memref<1x128xf32, #tpu.memory_space<vmem>>, %arg12: memref<8x128xf32, #tpu.memory_space<vmem>>) attributes {dimension_semantics = [#tpu.dimension_semantics<parallel>], iteration_bounds = array<i64: 1>, scalar_prefetch = 0 : i64, scratch_operands = 0 : i64, tpu.core_type = #tpu.core_type<tc>, window_params = [{transform_indices = @transform_0, window_bounds = array<i64: 64, 8>}, {pipeline_mode = #tpu.pipeline_mode<synchronous>, transform_indices = @transform_1, window_bounds = array<i64: 8, 128>}, {pipeline_mode = #tpu.pipeline_mode<synchronous>, transform_indices = @transform_2, window_bounds = array<i64: 32, 128>}, {pipeline_mode = #tpu.pipeline_mode<synchronous>, transform_indices = @transform_3, window_bounds = array<i64: 1, 128>}, {pipeline_mode = #tpu.pipeline_mode<synchronous>, transform_indices = @transform_4, window_bounds = array<i64: 32, 128>}, {pipeline_mode = #tpu.pipeline_mode<synchronous>, transform_indices = @transform_5, window_bounds = array<i64: 32, 128>}, {pipeline_mode = #tpu.pipeline_mode<synchronous>, transform_indices = @transform_6, window_bounds = array<i64: 1, 128>}, {pipeline_mode = #tpu.pipeline_mode<synchronous>, transform_indices = @transform_7, window_bounds = array<i64: 32, 128>}, {pipeline_mode = #tpu.pipeline_mode<synchronous>, transform_indices = @transform_8, window_bounds = array<i64: 1, 128>}, {pipeline_mode = #tpu.pipeline_mode<synchronous>, transform_indices = @transform_9, window_bounds = array<i64: 128, 128>}, {pipeline_mode = #tpu.pipeline_mode<synchronous>, transform_indices = @transform_10, window_bounds = array<i64: 1, 128>}, {transform_indices = @transform_11, window_bounds = array<i64: 8, 128>}]} {
    %c0 = arith.constant 0 : index
    %c0_0 = arith.constant 0 : index
    %0 = vector.load %arg2[%c0, %c0_0] : memref<8x128xbf16, #tpu.memory_space<vmem>>, vector<8x128xbf16>
    %c0_1 = arith.constant 0 : index
    %c0_2 = arith.constant 0 : index
    %1 = vector.load %arg3[%c0_1, %c0_2] : memref<32x128xbf16, #tpu.memory_space<vmem>>, vector<32x128xbf16>
    %c0_3 = arith.constant 0 : index
    %c0_4 = arith.constant 0 : index
    %2 = vector.load %arg5[%c0_3, %c0_4] : memref<32x128xbf16, #tpu.memory_space<vmem>>, vector<32x128xbf16>
    %c0_5 = arith.constant 0 : index
    %c0_6 = arith.constant 0 : index
    %3 = vector.load %arg6[%c0_5, %c0_6] : memref<32x128xbf16, #tpu.memory_space<vmem>>, vector<32x128xbf16>
    %c0_7 = arith.constant 0 : index
    %c0_8 = arith.constant 0 : index
    %4 = vector.load %arg1[%c0_7, %c0_8] : memref<64x8xbf16, #tpu.memory_space<vmem>>, vector<64x8xbf16>
    %cst = arith.constant dense<0.000000e+00> : vector<64x128xf32>
    %5 = tpu.matmul %4, %0, %cst {dimension_numbers = #tpu.dot_dimension_numbers<[1], [0], [0], [1], [0, 0, 1, 1], [], []>} : vector<64x8xbf16>, vector<8x128xbf16>, vector<64x128xf32> -> vector<64x128xf32>
    %c0_9 = arith.constant 0 : index
    %c0_10 = arith.constant 0 : index
    %6 = vector.load %arg4[%c0_9, %c0_10] : memref<1x128xf32, #tpu.memory_space<vmem>>, vector<1x128xf32>
    %7 = vector.broadcast %6 : vector<1x128xf32> to vector<64x128xf32>
    %8 = arith.addf %5, %7 : vector<64x128xf32>
    %c0_11 = arith.constant 0 : index
    %c0_12 = arith.constant 0 : index
    %9 = vector.load %arg7[%c0_11, %c0_12] : memref<1x128xf32, #tpu.memory_space<vmem>>, vector<1x128xf32>
    %10 = vector.shape_cast %9 : vector<1x128xf32> to vector<1x128xf32>
    %11 = vector.broadcast %10 : vector<1x128xf32> to vector<8x128xf32>
    %12 = tpu.iota {dimensions = array<i32: 1>} : vector<1x128xi32>
    %c64_i32 = arith.constant 64 : i32
    %13 = vector.broadcast %c64_i32 : i32 to vector<1x128xi32>
    %14 = arith.cmpi sge, %12, %13 : vector<1x128xi32>
    %c96_i32 = arith.constant 96 : i32
    %15 = vector.broadcast %c96_i32 : i32 to vector<1x128xi32>
    %16 = arith.cmpi slt, %12, %15 : vector<1x128xi32>
    %17 = arith.andi %14, %16 : vector<1x128xi1>
    %cst_13 = arith.constant 1.000000e+00 : f32
    %cst_14 = arith.constant 5.000000e-01 : f32
    %18 = vector.broadcast %cst_13 : f32 to vector<1x128xf32>
    %19 = vector.broadcast %cst_14 : f32 to vector<1x128xf32>
    %20 = arith.select %17, %18, %19 : vector<1x128xi1>, vector<1x128xf32>
    %21 = vector.shape_cast %20 : vector<1x128xf32> to vector<1x128xf32>
    %22 = vector.broadcast %21 : vector<1x128xf32> to vector<8x128xf32>
    %cst_15 = arith.constant 0.000000e+00 : f32
    %cst_16 = arith.constant 5.000000e-01 : f32
    %23 = vector.broadcast %cst_15 : f32 to vector<1x128xf32>
    %24 = vector.broadcast %cst_16 : f32 to vector<1x128xf32>
    %25 = arith.select %17, %23, %24 : vector<1x128xi1>, vector<1x128xf32>
    %26 = vector.shape_cast %25 : vector<1x128xf32> to vector<1x128xf32>
    %27 = vector.broadcast %26 : vector<1x128xf32> to vector<8x128xf32>
    %cst_17 = arith.constant 0.000000e+00 : f32
    %28 = vector.broadcast %cst_17 : f32 to vector<8x32xf32>
    %29 = vector.extract_strided_slice %8 {offsets = [0, 0], sizes = [8, 128], strides = [1, 1]} : vector<64x128xf32> to vector<8x128xf32>
    %30 = arith.truncf %28 : vector<8x32xf32> to vector<8x32xbf16>
    %cst_18 = arith.constant dense<0.000000e+00> : vector<8x128xf32>
    %31 = tpu.matmul %30, %1, %cst_18 {dimension_numbers = #tpu.dot_dimension_numbers<[1], [0], [0], [1], [0, 0, 1, 1], [], []>} : vector<8x32xbf16>, vector<32x128xbf16>, vector<8x128xf32> -> vector<8x128xf32>
    %32 = arith.addf %29, %31 : vector<8x128xf32>
    %33 = arith.mulf %32, %22 : vector<8x128xf32>
    %34 = math.tanh %33 : vector<8x128xf32>
    %35 = arith.mulf %22, %34 : vector<8x128xf32>
    %36 = arith.addf %35, %27 : vector<8x128xf32>
    %37 = vector.extract_strided_slice %36 {offsets = [0, 0], sizes = [8, 32], strides = [1, 1]} : vector<8x128xf32> to vector<8x32xf32>
    %38 = vector.extract_strided_slice %36 {offsets = [0, 32], sizes = [8, 32], strides = [1, 1]} : vector<8x128xf32> to vector<8x32xf32>
    %39 = vector.extract_strided_slice %36 {offsets = [0, 64], sizes = [8, 32], strides = [1, 1]} : vector<8x128xf32> to vector<8x32xf32>
    %40 = vector.extract_strided_slice %36 {offsets = [0, 96], sizes = [8, 32], strides = [1, 1]} : vector<8x128xf32> to vector<8x32xf32>
    %41 = arith.mulf %38, %28 : vector<8x32xf32>
    %42 = arith.mulf %37, %39 : vector<8x32xf32>
    %43 = arith.addf %41, %42 : vector<8x32xf32>
    %44 = math.tanh %43 : vector<8x32xf32>
    %45 = arith.mulf %40, %44 : vector<8x32xf32>
    %46 = math.tanh %45 : vector<8x32xf32>
    %47 = arith.truncf %46 : vector<8x32xf32> to vector<8x32xbf16>
    %cst_19 = arith.constant dense<0.000000e+00> : vector<8x128xf32>
    %48 = tpu.matmul %47, %2, %cst_19 {dimension_numbers = #tpu.dot_dimension_numbers<[1], [0], [0], [1], [0, 0, 1, 1], [], []>} : vector<8x32xbf16>, vector<32x128xbf16>, vector<8x128xf32> -> vector<8x128xf32>
    %49 = arith.truncf %28 : vector<8x32xf32> to vector<8x32xbf16>
    %cst_20 = arith.constant dense<0.000000e+00> : vector<8x128xf32>
    %50 = tpu.matmul %49, %3, %cst_20 {dimension_numbers = #tpu.dot_dimension_numbers<[1], [0], [0], [1], [0, 0, 1, 1], [], []>} : vector<8x32xbf16>, vector<32x128xbf16>, vector<8x128xf32> -> vector<8x128xf32>
    %51 = arith.addf %48, %50 : vector<8x128xf32>
    %52 = arith.addf %51, %11 : vector<8x128xf32>
    %53 = arith.mulf %52, %22 : vector<8x128xf32>
    %54 = math.tanh %53 : vector<8x128xf32>
    %55 = arith.mulf %22, %54 : vector<8x128xf32>
    %56 = arith.addf %55, %27 : vector<8x128xf32>
    %57 = vector.extract_strided_slice %56 {offsets = [0, 0], sizes = [8, 32], strides = [1, 1]} : vector<8x128xf32> to vector<8x32xf32>
    %58 = vector.extract_strided_slice %56 {offsets = [0, 32], sizes = [8, 32], strides = [1, 1]} : vector<8x128xf32> to vector<8x32xf32>
    %59 = vector.extract_strided_slice %56 {offsets = [0, 64], sizes = [8, 32], strides = [1, 1]} : vector<8x128xf32> to vector<8x32xf32>
    %60 = vector.extract_strided_slice %56 {offsets = [0, 96], sizes = [8, 32], strides = [1, 1]} : vector<8x128xf32> to vector<8x32xf32>
    %61 = arith.mulf %58, %28 : vector<8x32xf32>
    %62 = arith.mulf %57, %59 : vector<8x32xf32>
    %63 = arith.addf %61, %62 : vector<8x32xf32>
    %64 = math.tanh %63 : vector<8x32xf32>
    %65 = arith.mulf %60, %64 : vector<8x32xf32>
    %66 = vector.extract_strided_slice %8 {offsets = [8, 0], sizes = [8, 128], strides = [1, 1]} : vector<64x128xf32> to vector<8x128xf32>
    %67 = arith.truncf %45 : vector<8x32xf32> to vector<8x32xbf16>
    %cst_21 = arith.constant dense<0.000000e+00> : vector<8x128xf32>
    %68 = tpu.matmul %67, %1, %cst_21 {dimension_numbers = #tpu.dot_dimension_numbers<[1], [0], [0], [1], [0, 0, 1, 1], [], []>} : vector<8x32xbf16>, vector<32x128xbf16>, vector<8x128xf32> -> vector<8x128xf32>
    %69 = arith.addf %66, %68 : vector<8x128xf32>
    %70 = arith.mulf %69, %22 : vector<8x128xf32>
    %71 = math.tanh %70 : vector<8x128xf32>
    %72 = arith.mulf %22, %71 : vector<8x128xf32>
    %73 = arith.addf %72, %27 : vector<8x128xf32>
    %74 = vector.extract_strided_slice %73 {offsets = [0, 0], sizes = [8, 32], strides = [1, 1]} : vector<8x128xf32> to vector<8x32xf32>
    %75 = vector.extract_strided_slice %73 {offsets = [0, 32], sizes = [8, 32], strides = [1, 1]} : vector<8x128xf32> to vector<8x32xf32>
    %76 = vector.extract_strided_slice %73 {offsets = [0, 64], sizes = [8, 32], strides = [1, 1]} : vector<8x128xf32> to vector<8x32xf32>
    %77 = vector.extract_strided_slice %73 {offsets = [0, 96], sizes = [8, 32], strides = [1, 1]} : vector<8x128xf32> to vector<8x32xf32>
    %78 = arith.mulf %75, %43 : vector<8x32xf32>
    %79 = arith.mulf %74, %76 : vector<8x32xf32>
    %80 = arith.addf %78, %79 : vector<8x32xf32>
    %81 = math.tanh %80 : vector<8x32xf32>
    %82 = arith.mulf %77, %81 : vector<8x32xf32>
    %83 = math.tanh %82 : vector<8x32xf32>
    %84 = arith.truncf %83 : vector<8x32xf32> to vector<8x32xbf16>
    %cst_22 = arith.constant dense<0.000000e+00> : vector<8x128xf32>
    %85 = tpu.matmul %84, %2, %cst_22 {dimension_numbers = #tpu.dot_dimension_numbers<[1], [0], [0], [1], [0, 0, 1, 1], [], []>} : vector<8x32xbf16>, vector<32x128xbf16>, vector<8x128xf32> -> vector<8x128xf32>
    %86 = arith.truncf %65 : vector<8x32xf32> to vector<8x32xbf16>
    %cst_23 = arith.constant dense<0.000000e+00> : vector<8x128xf32>
    %87 = tpu.matmul %86, %3, %cst_23 {dimension_numbers = #tpu.dot_dimension_numbers<[1], [0], [0], [1], [0, 0, 1, 1], [], []>} : vector<8x32xbf16>, vector<32x128xbf16>, vector<8x128xf32> -> vector<8x128xf32>
    %88 = arith.addf %85, %87 : vector<8x128xf32>
    %89 = arith.addf %88, %11 : vector<8x128xf32>
    %90 = arith.mulf %89, %22 : vector<8x128xf32>
    %91 = math.tanh %90 : vector<8x128xf32>
    %92 = arith.mulf %22, %91 : vector<8x128xf32>
    %93 = arith.addf %92, %27 : vector<8x128xf32>
    %94 = vector.extract_strided_slice %93 {offsets = [0, 0], sizes = [8, 32], strides = [1, 1]} : vector<8x128xf32> to vector<8x32xf32>
    %95 = vector.extract_strided_slice %93 {offsets = [0, 32], sizes = [8, 32], strides = [1, 1]} : vector<8x128xf32> to vector<8x32xf32>
    %96 = vector.extract_strided_slice %93 {offsets = [0, 64], sizes = [8, 32], strides = [1, 1]} : vector<8x128xf32> to vector<8x32xf32>
    %97 = vector.extract_strided_slice %93 {offsets = [0, 96], sizes = [8, 32], strides = [1, 1]} : vector<8x128xf32> to vector<8x32xf32>
    %98 = arith.mulf %95, %63 : vector<8x32xf32>
    %99 = arith.mulf %94, %96 : vector<8x32xf32>
    %100 = arith.addf %98, %99 : vector<8x32xf32>
    %101 = math.tanh %100 : vector<8x32xf32>
    %102 = arith.mulf %97, %101 : vector<8x32xf32>
    %103 = vector.extract_strided_slice %8 {offsets = [16, 0], sizes = [8, 128], strides = [1, 1]} : vector<64x128xf32> to vector<8x128xf32>
    %104 = arith.truncf %82 : vector<8x32xf32> to vector<8x32xbf16>
    %cst_24 = arith.constant dense<0.000000e+00> : vector<8x128xf32>
    %105 = tpu.matmul %104, %1, %cst_24 {dimension_numbers = #tpu.dot_dimension_numbers<[1], [0], [0], [1], [0, 0, 1, 1], [], []>} : vector<8x32xbf16>, vector<32x128xbf16>, vector<8x128xf32> -> vector<8x128xf32>
    %106 = arith.addf %103, %105 : vector<8x128xf32>
    %107 = arith.mulf %106, %22 : vector<8x128xf32>
    %108 = math.tanh %107 : vector<8x128xf32>
    %109 = arith.mulf %22, %108 : vector<8x128xf32>
    %110 = arith.addf %109, %27 : vector<8x128xf32>
    %111 = vector.extract_strided_slice %110 {offsets = [0, 0], sizes = [8, 32], strides = [1, 1]} : vector<8x128xf32> to vector<8x32xf32>
    %112 = vector.extract_strided_slice %110 {offsets = [0, 32], sizes = [8, 32], strides = [1, 1]} : vector<8x128xf32> to vector<8x32xf32>
    %113 = vector.extract_strided_slice %110 {offsets = [0, 64], sizes = [8, 32], strides = [1, 1]} : vector<8x128xf32> to vector<8x32xf32>
    %114 = vector.extract_strided_slice %110 {offsets = [0, 96], sizes = [8, 32], strides = [1, 1]} : vector<8x128xf32> to vector<8x32xf32>
    %115 = arith.mulf %112, %80 : vector<8x32xf32>
    %116 = arith.mulf %111, %113 : vector<8x32xf32>
    %117 = arith.addf %115, %116 : vector<8x32xf32>
    %118 = math.tanh %117 : vector<8x32xf32>
    %119 = arith.mulf %114, %118 : vector<8x32xf32>
    %120 = math.tanh %119 : vector<8x32xf32>
    %121 = arith.truncf %120 : vector<8x32xf32> to vector<8x32xbf16>
    %cst_25 = arith.constant dense<0.000000e+00> : vector<8x128xf32>
    %122 = tpu.matmul %121, %2, %cst_25 {dimension_numbers = #tpu.dot_dimension_numbers<[1], [0], [0], [1], [0, 0, 1, 1], [], []>} : vector<8x32xbf16>, vector<32x128xbf16>, vector<8x128xf32> -> vector<8x128xf32>
    %123 = arith.truncf %102 : vector<8x32xf32> to vector<8x32xbf16>
    %cst_26 = arith.constant dense<0.000000e+00> : vector<8x128xf32>
    %124 = tpu.matmul %123, %3, %cst_26 {dimension_numbers = #tpu.dot_dimension_numbers<[1], [0], [0], [1], [0, 0, 1, 1], [], []>} : vector<8x32xbf16>, vector<32x128xbf16>, vector<8x128xf32> -> vector<8x128xf32>
    %125 = arith.addf %122, %124 : vector<8x128xf32>
    %126 = arith.addf %125, %11 : vector<8x128xf32>
    %127 = arith.mulf %126, %22 : vector<8x128xf32>
    %128 = math.tanh %127 : vector<8x128xf32>
    %129 = arith.mulf %22, %128 : vector<8x128xf32>
    %130 = arith.addf %129, %27 : vector<8x128xf32>
    %131 = vector.extract_strided_slice %130 {offsets = [0, 0], sizes = [8, 32], strides = [1, 1]} : vector<8x128xf32> to vector<8x32xf32>
    %132 = vector.extract_strided_slice %130 {offsets = [0, 32], sizes = [8, 32], strides = [1, 1]} : vector<8x128xf32> to vector<8x32xf32>
    %133 = vector.extract_strided_slice %130 {offsets = [0, 64], sizes = [8, 32], strides = [1, 1]} : vector<8x128xf32> to vector<8x32xf32>
    %134 = vector.extract_strided_slice %130 {offsets = [0, 96], sizes = [8, 32], strides = [1, 1]} : vector<8x128xf32> to vector<8x32xf32>
    %135 = arith.mulf %132, %100 : vector<8x32xf32>
    %136 = arith.mulf %131, %133 : vector<8x32xf32>
    %137 = arith.addf %135, %136 : vector<8x32xf32>
    %138 = math.tanh %137 : vector<8x32xf32>
    %139 = arith.mulf %134, %138 : vector<8x32xf32>
    %140 = vector.extract_strided_slice %8 {offsets = [24, 0], sizes = [8, 128], strides = [1, 1]} : vector<64x128xf32> to vector<8x128xf32>
    %141 = arith.truncf %119 : vector<8x32xf32> to vector<8x32xbf16>
    %cst_27 = arith.constant dense<0.000000e+00> : vector<8x128xf32>
    %142 = tpu.matmul %141, %1, %cst_27 {dimension_numbers = #tpu.dot_dimension_numbers<[1], [0], [0], [1], [0, 0, 1, 1], [], []>} : vector<8x32xbf16>, vector<32x128xbf16>, vector<8x128xf32> -> vector<8x128xf32>
    %143 = arith.addf %140, %142 : vector<8x128xf32>
    %144 = arith.mulf %143, %22 : vector<8x128xf32>
    %145 = math.tanh %144 : vector<8x128xf32>
    %146 = arith.mulf %22, %145 : vector<8x128xf32>
    %147 = arith.addf %146, %27 : vector<8x128xf32>
    %148 = vector.extract_strided_slice %147 {offsets = [0, 0], sizes = [8, 32], strides = [1, 1]} : vector<8x128xf32> to vector<8x32xf32>
    %149 = vector.extract_strided_slice %147 {offsets = [0, 32], sizes = [8, 32], strides = [1, 1]} : vector<8x128xf32> to vector<8x32xf32>
    %150 = vector.extract_strided_slice %147 {offsets = [0, 64], sizes = [8, 32], strides = [1, 1]} : vector<8x128xf32> to vector<8x32xf32>
    %151 = vector.extract_strided_slice %147 {offsets = [0, 96], sizes = [8, 32], strides = [1, 1]} : vector<8x128xf32> to vector<8x32xf32>
    %152 = arith.mulf %149, %117 : vector<8x32xf32>
    %153 = arith.mulf %148, %150 : vector<8x32xf32>
    %154 = arith.addf %152, %153 : vector<8x32xf32>
    %155 = math.tanh %154 : vector<8x32xf32>
    %156 = arith.mulf %151, %155 : vector<8x32xf32>
    %157 = math.tanh %156 : vector<8x32xf32>
    %158 = arith.truncf %157 : vector<8x32xf32> to vector<8x32xbf16>
    %cst_28 = arith.constant dense<0.000000e+00> : vector<8x128xf32>
    %159 = tpu.matmul %158, %2, %cst_28 {dimension_numbers = #tpu.dot_dimension_numbers<[1], [0], [0], [1], [0, 0, 1, 1], [], []>} : vector<8x32xbf16>, vector<32x128xbf16>, vector<8x128xf32> -> vector<8x128xf32>
    %160 = arith.truncf %139 : vector<8x32xf32> to vector<8x32xbf16>
    %cst_29 = arith.constant dense<0.000000e+00> : vector<8x128xf32>
    %161 = tpu.matmul %160, %3, %cst_29 {dimension_numbers = #tpu.dot_dimension_numbers<[1], [0], [0], [1], [0, 0, 1, 1], [], []>} : vector<8x32xbf16>, vector<32x128xbf16>, vector<8x128xf32> -> vector<8x128xf32>
    %162 = arith.addf %159, %161 : vector<8x128xf32>
    %163 = arith.addf %162, %11 : vector<8x128xf32>
    %164 = arith.mulf %163, %22 : vector<8x128xf32>
    %165 = math.tanh %164 : vector<8x128xf32>
    %166 = arith.mulf %22, %165 : vector<8x128xf32>
    %167 = arith.addf %166, %27 : vector<8x128xf32>
    %168 = vector.extract_strided_slice %167 {offsets = [0, 0], sizes = [8, 32], strides = [1, 1]} : vector<8x128xf32> to vector<8x32xf32>
    %169 = vector.extract_strided_slice %167 {offsets = [0, 32], sizes = [8, 32], strides = [1, 1]} : vector<8x128xf32> to vector<8x32xf32>
    %170 = vector.extract_strided_slice %167 {offsets = [0, 64], sizes = [8, 32], strides = [1, 1]} : vector<8x128xf32> to vector<8x32xf32>
    %171 = vector.extract_strided_slice %167 {offsets = [0, 96], sizes = [8, 32], strides = [1, 1]} : vector<8x128xf32> to vector<8x32xf32>
    %172 = arith.mulf %169, %137 : vector<8x32xf32>
    %173 = arith.mulf %168, %170 : vector<8x32xf32>
    %174 = arith.addf %172, %173 : vector<8x32xf32>
    %175 = math.tanh %174 : vector<8x32xf32>
    %176 = arith.mulf %171, %175 : vector<8x32xf32>
    %177 = vector.extract_strided_slice %8 {offsets = [32, 0], sizes = [8, 128], strides = [1, 1]} : vector<64x128xf32> to vector<8x128xf32>
    %178 = arith.truncf %156 : vector<8x32xf32> to vector<8x32xbf16>
    %cst_30 = arith.constant dense<0.000000e+00> : vector<8x128xf32>
    %179 = tpu.matmul %178, %1, %cst_30 {dimension_numbers = #tpu.dot_dimension_numbers<[1], [0], [0], [1], [0, 0, 1, 1], [], []>} : vector<8x32xbf16>, vector<32x128xbf16>, vector<8x128xf32> -> vector<8x128xf32>
    %180 = arith.addf %177, %179 : vector<8x128xf32>
    %181 = arith.mulf %180, %22 : vector<8x128xf32>
    %182 = math.tanh %181 : vector<8x128xf32>
    %183 = arith.mulf %22, %182 : vector<8x128xf32>
    %184 = arith.addf %183, %27 : vector<8x128xf32>
    %185 = vector.extract_strided_slice %184 {offsets = [0, 0], sizes = [8, 32], strides = [1, 1]} : vector<8x128xf32> to vector<8x32xf32>
    %186 = vector.extract_strided_slice %184 {offsets = [0, 32], sizes = [8, 32], strides = [1, 1]} : vector<8x128xf32> to vector<8x32xf32>
    %187 = vector.extract_strided_slice %184 {offsets = [0, 64], sizes = [8, 32], strides = [1, 1]} : vector<8x128xf32> to vector<8x32xf32>
    %188 = vector.extract_strided_slice %184 {offsets = [0, 96], sizes = [8, 32], strides = [1, 1]} : vector<8x128xf32> to vector<8x32xf32>
    %189 = arith.mulf %186, %154 : vector<8x32xf32>
    %190 = arith.mulf %185, %187 : vector<8x32xf32>
    %191 = arith.addf %189, %190 : vector<8x32xf32>
    %192 = math.tanh %191 : vector<8x32xf32>
    %193 = arith.mulf %188, %192 : vector<8x32xf32>
    %194 = math.tanh %193 : vector<8x32xf32>
    %195 = arith.truncf %194 : vector<8x32xf32> to vector<8x32xbf16>
    %cst_31 = arith.constant dense<0.000000e+00> : vector<8x128xf32>
    %196 = tpu.matmul %195, %2, %cst_31 {dimension_numbers = #tpu.dot_dimension_numbers<[1], [0], [0], [1], [0, 0, 1, 1], [], []>} : vector<8x32xbf16>, vector<32x128xbf16>, vector<8x128xf32> -> vector<8x128xf32>
    %197 = arith.truncf %176 : vector<8x32xf32> to vector<8x32xbf16>
    %cst_32 = arith.constant dense<0.000000e+00> : vector<8x128xf32>
    %198 = tpu.matmul %197, %3, %cst_32 {dimension_numbers = #tpu.dot_dimension_numbers<[1], [0], [0], [1], [0, 0, 1, 1], [], []>} : vector<8x32xbf16>, vector<32x128xbf16>, vector<8x128xf32> -> vector<8x128xf32>
    %199 = arith.addf %196, %198 : vector<8x128xf32>
    %200 = arith.addf %199, %11 : vector<8x128xf32>
    %201 = arith.mulf %200, %22 : vector<8x128xf32>
    %202 = math.tanh %201 : vector<8x128xf32>
    %203 = arith.mulf %22, %202 : vector<8x128xf32>
    %204 = arith.addf %203, %27 : vector<8x128xf32>
    %205 = vector.extract_strided_slice %204 {offsets = [0, 0], sizes = [8, 32], strides = [1, 1]} : vector<8x128xf32> to vector<8x32xf32>
    %206 = vector.extract_strided_slice %204 {offsets = [0, 32], sizes = [8, 32], strides = [1, 1]} : vector<8x128xf32> to vector<8x32xf32>
    %207 = vector.extract_strided_slice %204 {offsets = [0, 64], sizes = [8, 32], strides = [1, 1]} : vector<8x128xf32> to vector<8x32xf32>
    %208 = vector.extract_strided_slice %204 {offsets = [0, 96], sizes = [8, 32], strides = [1, 1]} : vector<8x128xf32> to vector<8x32xf32>
    %209 = arith.mulf %206, %174 : vector<8x32xf32>
    %210 = arith.mulf %205, %207 : vector<8x32xf32>
    %211 = arith.addf %209, %210 : vector<8x32xf32>
    %212 = math.tanh %211 : vector<8x32xf32>
    %213 = arith.mulf %208, %212 : vector<8x32xf32>
    %214 = vector.extract_strided_slice %8 {offsets = [40, 0], sizes = [8, 128], strides = [1, 1]} : vector<64x128xf32> to vector<8x128xf32>
    %215 = arith.truncf %193 : vector<8x32xf32> to vector<8x32xbf16>
    %cst_33 = arith.constant dense<0.000000e+00> : vector<8x128xf32>
    %216 = tpu.matmul %215, %1, %cst_33 {dimension_numbers = #tpu.dot_dimension_numbers<[1], [0], [0], [1], [0, 0, 1, 1], [], []>} : vector<8x32xbf16>, vector<32x128xbf16>, vector<8x128xf32> -> vector<8x128xf32>
    %217 = arith.addf %214, %216 : vector<8x128xf32>
    %218 = arith.mulf %217, %22 : vector<8x128xf32>
    %219 = math.tanh %218 : vector<8x128xf32>
    %220 = arith.mulf %22, %219 : vector<8x128xf32>
    %221 = arith.addf %220, %27 : vector<8x128xf32>
    %222 = vector.extract_strided_slice %221 {offsets = [0, 0], sizes = [8, 32], strides = [1, 1]} : vector<8x128xf32> to vector<8x32xf32>
    %223 = vector.extract_strided_slice %221 {offsets = [0, 32], sizes = [8, 32], strides = [1, 1]} : vector<8x128xf32> to vector<8x32xf32>
    %224 = vector.extract_strided_slice %221 {offsets = [0, 64], sizes = [8, 32], strides = [1, 1]} : vector<8x128xf32> to vector<8x32xf32>
    %225 = vector.extract_strided_slice %221 {offsets = [0, 96], sizes = [8, 32], strides = [1, 1]} : vector<8x128xf32> to vector<8x32xf32>
    %226 = arith.mulf %223, %191 : vector<8x32xf32>
    %227 = arith.mulf %222, %224 : vector<8x32xf32>
    %228 = arith.addf %226, %227 : vector<8x32xf32>
    %229 = math.tanh %228 : vector<8x32xf32>
    %230 = arith.mulf %225, %229 : vector<8x32xf32>
    %231 = math.tanh %230 : vector<8x32xf32>
    %232 = arith.truncf %231 : vector<8x32xf32> to vector<8x32xbf16>
    %cst_34 = arith.constant dense<0.000000e+00> : vector<8x128xf32>
    %233 = tpu.matmul %232, %2, %cst_34 {dimension_numbers = #tpu.dot_dimension_numbers<[1], [0], [0], [1], [0, 0, 1, 1], [], []>} : vector<8x32xbf16>, vector<32x128xbf16>, vector<8x128xf32> -> vector<8x128xf32>
    %234 = arith.truncf %213 : vector<8x32xf32> to vector<8x32xbf16>
    %cst_35 = arith.constant dense<0.000000e+00> : vector<8x128xf32>
    %235 = tpu.matmul %234, %3, %cst_35 {dimension_numbers = #tpu.dot_dimension_numbers<[1], [0], [0], [1], [0, 0, 1, 1], [], []>} : vector<8x32xbf16>, vector<32x128xbf16>, vector<8x128xf32> -> vector<8x128xf32>
    %236 = arith.addf %233, %235 : vector<8x128xf32>
    %237 = arith.addf %236, %11 : vector<8x128xf32>
    %238 = arith.mulf %237, %22 : vector<8x128xf32>
    %239 = math.tanh %238 : vector<8x128xf32>
    %240 = arith.mulf %22, %239 : vector<8x128xf32>
    %241 = arith.addf %240, %27 : vector<8x128xf32>
    %242 = vector.extract_strided_slice %241 {offsets = [0, 0], sizes = [8, 32], strides = [1, 1]} : vector<8x128xf32> to vector<8x32xf32>
    %243 = vector.extract_strided_slice %241 {offsets = [0, 32], sizes = [8, 32], strides = [1, 1]} : vector<8x128xf32> to vector<8x32xf32>
    %244 = vector.extract_strided_slice %241 {offsets = [0, 64], sizes = [8, 32], strides = [1, 1]} : vector<8x128xf32> to vector<8x32xf32>
    %245 = vector.extract_strided_slice %241 {offsets = [0, 96], sizes = [8, 32], strides = [1, 1]} : vector<8x128xf32> to vector<8x32xf32>
    %246 = arith.mulf %243, %211 : vector<8x32xf32>
    %247 = arith.mulf %242, %244 : vector<8x32xf32>
    %248 = arith.addf %246, %247 : vector<8x32xf32>
    %249 = math.tanh %248 : vector<8x32xf32>
    %250 = arith.mulf %245, %249 : vector<8x32xf32>
    %251 = vector.extract_strided_slice %8 {offsets = [48, 0], sizes = [8, 128], strides = [1, 1]} : vector<64x128xf32> to vector<8x128xf32>
    %252 = arith.truncf %230 : vector<8x32xf32> to vector<8x32xbf16>
    %cst_36 = arith.constant dense<0.000000e+00> : vector<8x128xf32>
    %253 = tpu.matmul %252, %1, %cst_36 {dimension_numbers = #tpu.dot_dimension_numbers<[1], [0], [0], [1], [0, 0, 1, 1], [], []>} : vector<8x32xbf16>, vector<32x128xbf16>, vector<8x128xf32> -> vector<8x128xf32>
    %254 = arith.addf %251, %253 : vector<8x128xf32>
    %255 = arith.mulf %254, %22 : vector<8x128xf32>
    %256 = math.tanh %255 : vector<8x128xf32>
    %257 = arith.mulf %22, %256 : vector<8x128xf32>
    %258 = arith.addf %257, %27 : vector<8x128xf32>
    %259 = vector.extract_strided_slice %258 {offsets = [0, 0], sizes = [8, 32], strides = [1, 1]} : vector<8x128xf32> to vector<8x32xf32>
    %260 = vector.extract_strided_slice %258 {offsets = [0, 32], sizes = [8, 32], strides = [1, 1]} : vector<8x128xf32> to vector<8x32xf32>
    %261 = vector.extract_strided_slice %258 {offsets = [0, 64], sizes = [8, 32], strides = [1, 1]} : vector<8x128xf32> to vector<8x32xf32>
    %262 = vector.extract_strided_slice %258 {offsets = [0, 96], sizes = [8, 32], strides = [1, 1]} : vector<8x128xf32> to vector<8x32xf32>
    %263 = arith.mulf %260, %228 : vector<8x32xf32>
    %264 = arith.mulf %259, %261 : vector<8x32xf32>
    %265 = arith.addf %263, %264 : vector<8x32xf32>
    %266 = math.tanh %265 : vector<8x32xf32>
    %267 = arith.mulf %262, %266 : vector<8x32xf32>
    %268 = math.tanh %267 : vector<8x32xf32>
    %269 = arith.truncf %268 : vector<8x32xf32> to vector<8x32xbf16>
    %cst_37 = arith.constant dense<0.000000e+00> : vector<8x128xf32>
    %270 = tpu.matmul %269, %2, %cst_37 {dimension_numbers = #tpu.dot_dimension_numbers<[1], [0], [0], [1], [0, 0, 1, 1], [], []>} : vector<8x32xbf16>, vector<32x128xbf16>, vector<8x128xf32> -> vector<8x128xf32>
    %271 = arith.truncf %250 : vector<8x32xf32> to vector<8x32xbf16>
    %cst_38 = arith.constant dense<0.000000e+00> : vector<8x128xf32>
    %272 = tpu.matmul %271, %3, %cst_38 {dimension_numbers = #tpu.dot_dimension_numbers<[1], [0], [0], [1], [0, 0, 1, 1], [], []>} : vector<8x32xbf16>, vector<32x128xbf16>, vector<8x128xf32> -> vector<8x128xf32>
    %273 = arith.addf %270, %272 : vector<8x128xf32>
    %274 = arith.addf %273, %11 : vector<8x128xf32>
    %275 = arith.mulf %274, %22 : vector<8x128xf32>
    %276 = math.tanh %275 : vector<8x128xf32>
    %277 = arith.mulf %22, %276 : vector<8x128xf32>
    %278 = arith.addf %277, %27 : vector<8x128xf32>
    %279 = vector.extract_strided_slice %278 {offsets = [0, 0], sizes = [8, 32], strides = [1, 1]} : vector<8x128xf32> to vector<8x32xf32>
    %280 = vector.extract_strided_slice %278 {offsets = [0, 32], sizes = [8, 32], strides = [1, 1]} : vector<8x128xf32> to vector<8x32xf32>
    %281 = vector.extract_strided_slice %278 {offsets = [0, 64], sizes = [8, 32], strides = [1, 1]} : vector<8x128xf32> to vector<8x32xf32>
    %282 = vector.extract_strided_slice %278 {offsets = [0, 96], sizes = [8, 32], strides = [1, 1]} : vector<8x128xf32> to vector<8x32xf32>
    %283 = arith.mulf %280, %248 : vector<8x32xf32>
    %284 = arith.mulf %279, %281 : vector<8x32xf32>
    %285 = arith.addf %283, %284 : vector<8x32xf32>
    %286 = math.tanh %285 : vector<8x32xf32>
    %287 = arith.mulf %282, %286 : vector<8x32xf32>
    %288 = vector.extract_strided_slice %8 {offsets = [56, 0], sizes = [8, 128], strides = [1, 1]} : vector<64x128xf32> to vector<8x128xf32>
    %289 = arith.truncf %267 : vector<8x32xf32> to vector<8x32xbf16>
    %cst_39 = arith.constant dense<0.000000e+00> : vector<8x128xf32>
    %290 = tpu.matmul %289, %1, %cst_39 {dimension_numbers = #tpu.dot_dimension_numbers<[1], [0], [0], [1], [0, 0, 1, 1], [], []>} : vector<8x32xbf16>, vector<32x128xbf16>, vector<8x128xf32> -> vector<8x128xf32>
    %291 = arith.addf %288, %290 : vector<8x128xf32>
    %292 = arith.mulf %291, %22 : vector<8x128xf32>
    %293 = math.tanh %292 : vector<8x128xf32>
    %294 = arith.mulf %22, %293 : vector<8x128xf32>
    %295 = arith.addf %294, %27 : vector<8x128xf32>
    %296 = vector.extract_strided_slice %295 {offsets = [0, 0], sizes = [8, 32], strides = [1, 1]} : vector<8x128xf32> to vector<8x32xf32>
    %297 = vector.extract_strided_slice %295 {offsets = [0, 32], sizes = [8, 32], strides = [1, 1]} : vector<8x128xf32> to vector<8x32xf32>
    %298 = vector.extract_strided_slice %295 {offsets = [0, 64], sizes = [8, 32], strides = [1, 1]} : vector<8x128xf32> to vector<8x32xf32>
    %299 = vector.extract_strided_slice %295 {offsets = [0, 96], sizes = [8, 32], strides = [1, 1]} : vector<8x128xf32> to vector<8x32xf32>
    %300 = arith.mulf %297, %265 : vector<8x32xf32>
    %301 = arith.mulf %296, %298 : vector<8x32xf32>
    %302 = arith.addf %300, %301 : vector<8x32xf32>
    %303 = math.tanh %302 : vector<8x32xf32>
    %304 = arith.mulf %299, %303 : vector<8x32xf32>
    %305 = math.tanh %304 : vector<8x32xf32>
    %306 = arith.truncf %305 : vector<8x32xf32> to vector<8x32xbf16>
    %cst_40 = arith.constant dense<0.000000e+00> : vector<8x128xf32>
    %307 = tpu.matmul %306, %2, %cst_40 {dimension_numbers = #tpu.dot_dimension_numbers<[1], [0], [0], [1], [0, 0, 1, 1], [], []>} : vector<8x32xbf16>, vector<32x128xbf16>, vector<8x128xf32> -> vector<8x128xf32>
    %308 = arith.truncf %287 : vector<8x32xf32> to vector<8x32xbf16>
    %cst_41 = arith.constant dense<0.000000e+00> : vector<8x128xf32>
    %309 = tpu.matmul %308, %3, %cst_41 {dimension_numbers = #tpu.dot_dimension_numbers<[1], [0], [0], [1], [0, 0, 1, 1], [], []>} : vector<8x32xbf16>, vector<32x128xbf16>, vector<8x128xf32> -> vector<8x128xf32>
    %310 = arith.addf %307, %309 : vector<8x128xf32>
    %311 = arith.addf %310, %11 : vector<8x128xf32>
    %312 = arith.mulf %311, %22 : vector<8x128xf32>
    %313 = math.tanh %312 : vector<8x128xf32>
    %314 = arith.mulf %22, %313 : vector<8x128xf32>
    %315 = arith.addf %314, %27 : vector<8x128xf32>
    %316 = vector.extract_strided_slice %315 {offsets = [0, 0], sizes = [8, 32], strides = [1, 1]} : vector<8x128xf32> to vector<8x32xf32>
    %317 = vector.extract_strided_slice %315 {offsets = [0, 32], sizes = [8, 32], strides = [1, 1]} : vector<8x128xf32> to vector<8x32xf32>
    %318 = vector.extract_strided_slice %315 {offsets = [0, 64], sizes = [8, 32], strides = [1, 1]} : vector<8x128xf32> to vector<8x32xf32>
    %319 = vector.extract_strided_slice %315 {offsets = [0, 96], sizes = [8, 32], strides = [1, 1]} : vector<8x128xf32> to vector<8x32xf32>
    %320 = arith.mulf %317, %285 : vector<8x32xf32>
    %321 = arith.mulf %316, %318 : vector<8x32xf32>
    %322 = arith.addf %320, %321 : vector<8x32xf32>
    %323 = math.tanh %322 : vector<8x32xf32>
    %324 = arith.mulf %319, %323 : vector<8x32xf32>
    %325 = math.tanh %324 : vector<8x32xf32>
    %326 = arith.truncf %325 : vector<8x32xf32> to vector<8x32xbf16>
    %c0_42 = arith.constant 0 : index
    %c0_43 = arith.constant 0 : index
    %327 = vector.load %arg8[%c0_42, %c0_43] : memref<32x128xbf16, #tpu.memory_space<vmem>>, vector<32x128xbf16>
    %cst_44 = arith.constant dense<0.000000e+00> : vector<8x128xf32>
    %328 = tpu.matmul %326, %327, %cst_44 {dimension_numbers = #tpu.dot_dimension_numbers<[1], [0], [0], [1], [0, 0, 1, 1], [], []>} : vector<8x32xbf16>, vector<32x128xbf16>, vector<8x128xf32> -> vector<8x128xf32>
    %c0_45 = arith.constant 0 : index
    %c0_46 = arith.constant 0 : index
    %329 = vector.load %arg9[%c0_45, %c0_46] : memref<1x128xf32, #tpu.memory_space<vmem>>, vector<1x128xf32>
    %330 = vector.broadcast %329 : vector<1x128xf32> to vector<8x128xf32>
    %331 = arith.addf %328, %330 : vector<8x128xf32>
    %cst_47 = arith.constant 0.000000e+00 : f32
    %332 = vector.broadcast %cst_47 : f32 to vector<8x128xf32>
    %333 = arith.maximumf %331, %332 : vector<8x128xf32>
    %334 = arith.truncf %333 : vector<8x128xf32> to vector<8x128xbf16>
    %c0_48 = arith.constant 0 : index
    %c0_49 = arith.constant 0 : index
    %335 = vector.load %arg10[%c0_48, %c0_49] : memref<128x128xbf16, #tpu.memory_space<vmem>>, vector<128x128xbf16>
    %cst_50 = arith.constant dense<0.000000e+00> : vector<8x128xf32>
    %336 = tpu.matmul %334, %335, %cst_50 {dimension_numbers = #tpu.dot_dimension_numbers<[1], [0], [0], [1], [0, 0, 1, 1], [], []>} : vector<8x128xbf16>, vector<128x128xbf16>, vector<8x128xf32> -> vector<8x128xf32>
    %c0_51 = arith.constant 0 : index
    %c0_52 = arith.constant 0 : index
    %337 = vector.load %arg11[%c0_51, %c0_52] : memref<1x128xf32, #tpu.memory_space<vmem>>, vector<1x128xf32>
    %338 = vector.broadcast %337 : vector<1x128xf32> to vector<8x128xf32>
    %339 = arith.addf %336, %338 : vector<8x128xf32>
    %c0_53 = arith.constant 0 : index
    %c0_54 = arith.constant 0 : index
    %340 = vector.load %arg12[%c0_53, %c0_54] : memref<8x128xf32, #tpu.memory_space<vmem>>, vector<8x128xf32>
    tpu.vector_store %arg12[%c0_53, %c0_54], %339 {strides = array<i32>} : memref<8x128xf32, #tpu.memory_space<vmem>>, vector<8x128xf32>,
    return
  }
  func.func @transform_0(%arg0: i32) -> (i32, i32) {
    %c0_i32 = arith.constant 0 : i32
    %c0_i32_0 = arith.constant 0 : i32
    return %arg0, %c0_i32 : i32, i32
  }
  func.func @transform_1(%arg0: i32) -> (i32, i32) {
    %c0_i32 = arith.constant 0 : i32
    %c0_i32_0 = arith.constant 0 : i32
    %c0_i32_1 = arith.constant 0 : i32
    return %c0_i32, %c0_i32_0 : i32, i32
  }
  func.func @transform_2(%arg0: i32) -> (i32, i32) {
    %c0_i32 = arith.constant 0 : i32
    %c0_i32_0 = arith.constant 0 : i32
    %c0_i32_1 = arith.constant 0 : i32
    return %c0_i32, %c0_i32_0 : i32, i32
  }
  func.func @transform_3(%arg0: i32) -> (i32, i32) {
    %c0_i32 = arith.constant 0 : i32
    %c0_i32_0 = arith.constant 0 : i32
    %c0_i32_1 = arith.constant 0 : i32
    return %c0_i32, %c0_i32_0 : i32, i32
  }
  func.func @transform_4(%arg0: i32) -> (i32, i32) {
    %c0_i32 = arith.constant 0 : i32
    %c0_i32_0 = arith.constant 0 : i32
    %c0_i32_1 = arith.constant 0 : i32
    return %c0_i32, %c0_i32_0 : i32, i32
  }
  func.func @transform_5(%arg0: i32) -> (i32, i32) {
    %c0_i32 = arith.constant 0 : i32
    %c0_i32_0 = arith.constant 0 : i32
    %c0_i32_1 = arith.constant 0 : i32
    return %c0_i32, %c0_i32_0 : i32, i32
  }
  func.func @transform_6(%arg0: i32) -> (i32, i32) {
    %c0_i32 = arith.constant 0 : i32
    %c0_i32_0 = arith.constant 0 : i32
    %c0_i32_1 = arith.constant 0 : i32
    return %c0_i32, %c0_i32_0 : i32, i32
  }
  func.func @transform_7(%arg0: i32) -> (i32, i32) {
    %c0_i32 = arith.constant 0 : i32
    %c0_i32_0 = arith.constant 0 : i32
    %c0_i32_1 = arith.constant 0 : i32
    return %c0_i32, %c0_i32_0 : i32, i32
  }
  func.func @transform_8(%arg0: i32) -> (i32, i32) {
    %c0_i32 = arith.constant 0 : i32
    %c0_i32_0 = arith.constant 0 : i32
    %c0_i32_1 = arith.constant 0 : i32
    return %c0_i32, %c0_i32_0 : i32, i32
  }
  func.func @transform_9(%arg0: i32) -> (i32, i32) {
    %c0_i32 = arith.constant 0 : i32
    %c0_i32_0 = arith.constant 0 : i32
    %c0_i32_1 = arith.constant 0 : i32
    return %c0_i32, %c0_i32_0 : i32, i32
  }
  func.func @transform_10(%arg0: i32) -> (i32, i32) {
    %c0_i32 = arith.constant 0 : i32
    %c0_i32_0 = arith.constant 0 : i32
    %c0_i32_1 = arith.constant 0 : i32
    return %c0_i32, %c0_i32_0 : i32, i32
  }
  func.func @transform_11(%arg0: i32) -> (i32, i32) {
    %c0_i32 = arith.constant 0 : i32
    %c0_i32_0 = arith.constant 0 : i32
    return %arg0, %c0_i32 : i32, i32
  }
}

</mosaic_0001>

<llo_original>
// kernel: tpu_custom_call.1
$region0: #{tpu_custom_call.1}
  #allocation0 [shape = 'u32[]', space=smem, size = 0x4, offset = 0x4, fixed_abs, tag = 'smem constant byte address 0x4 - core index']
  #allocation1 [shape = 'u32[72,128]{1,0:T(1,128)}', space=vmem, size = 0x9000, scoped, tag = 'internal scratch']
  %s0 = inlined_call_operand.vmem [shape: bf16[64,8], index: 0, kind: input, shape index: {}]
  %s1 = inlined_call_operand.vmem [shape: bf16[8,128], index: 1, kind: input, shape index: {}]
  %s2 = inlined_call_operand.vmem [shape: bf16[32,128], index: 2, kind: input, shape index: {}]
  %s3 = inlined_call_operand.vmem [shape: f32[1,128], index: 3, kind: input, shape index: {}]
  %s4 = inlined_call_operand.vmem [shape: bf16[32,128], index: 4, kind: input, shape index: {}]
  %s5 = inlined_call_operand.hbm [shape: bf16[32,128], index: 5, kind: input, shape index: {}]
  %s6 = inlined_call_operand.vmem [shape: f32[1,128], index: 6, kind: input, shape index: {}]
  %s7 = inlined_call_operand.hbm [shape: bf16[32,128], index: 7, kind: input, shape index: {}]
  %s8 = inlined_call_operand.vmem [shape: f32[1,128], index: 8, kind: input, shape index: {}]
  %s9 = inlined_call_operand.hbm [shape: bf16[128,128], index: 9, kind: input, shape index: {}]
  %s10 = inlined_call_operand.vmem [shape: f32[1,128], index: 10, kind: input, shape index: {}]
  %s11 = inlined_call_operand.hbm [shape: f32[8,128], index: 11, kind: output, shape index: {}]
  %s12 = sld [smem:[#allocation0]]
  $region66: #{tpu_custom_call.1} parent=0
    _
  %s14 = ssub.s32 1, %s12
  %s15 = scalar_select 0, %s14, %s12
  $region1: #{tpu_custom_call.1} parent=0
    #allocation2 [shape = 'u8[8192]{0}', space=vmem, size = 0x2000, scoped, tag = 'input window, operand 5, single buffered']
    #allocation3 [shape = 's32[1]{0}', space=sflag, size = 0x4, scoped, tag = 'scoped memory for tpu_custom_call.1']
    #allocation4 [shape = 's32[1]{0}', space=sflag, size = 0x4, scoped, tag = 'scoped memory for tpu_custom_call.1']
    #allocation5 [shape = 'u8[8192]{0}', space=vmem, size = 0x2000, scoped, tag = 'input window, operand 7, single buffered']
    #allocation6 [shape = 's32[1]{0}', space=sflag, size = 0x4, scoped, tag = 'scoped memory for tpu_custom_call.1']
    #allocation7 [shape = 'u8[32768]{0}', space=vmem, size = 0x8000, scoped, tag = 'input window, operand 9, single buffered']
    #allocation8 [shape = 'u8[4096]{0}', space=vmem, size = 0x1000, scoped, tag = 'output window, operand 0, single buffered']
    %16 = vsyncpa [#allocation3], 0
    %17 = vsyncpa [#allocation6], 0
    %18 = vsyncpa [#allocation4], 0
    // Predicated region
    $region2: #{tpu_custom_call.1} parent=1 // pred_check
      _
    $region3: #{tpu_custom_call.1} parent=1 // pred_check_branch
      %20 = sbr.rel (0) target = $region5
    $region4: #{tpu_custom_call.1} parent=1 // pred_region
      _
    $region5: #{tpu_custom_call.1} parent=1 // pred_fallthru
      _
    // Predicated region
    $region6: #{tpu_custom_call.1} parent=1 // pred_check
      _
    $region7: #{tpu_custom_call.1} parent=1 // pred_check_branch
      %22 = sbr.rel (0) target = $region9
    $region8: #{tpu_custom_call.1} parent=1 // pred_region
      _
    $region9: #{tpu_custom_call.1} parent=1 // pred_fallthru
      _
    // Predicated region
    $region10: #{tpu_custom_call.1} parent=1 // pred_check
      _
    $region11: #{tpu_custom_call.1} parent=1 // pred_check_branch
      %24 = sbr.rel (0) target = $region13
    $region12: #{tpu_custom_call.1} parent=1 // pred_region
      _
    $region13: #{tpu_custom_call.1} parent=1 // pred_fallthru
      _
    // Predicated region
    $region14: #{tpu_custom_call.1} parent=1 // pred_check
      _
    $region15: #{tpu_custom_call.1} parent=1 // pred_check_branch
      %26 = sbr.rel (0) target = $region17
    $region16: #{tpu_custom_call.1} parent=1 // pred_region
      _
    $region17: #{tpu_custom_call.1} parent=1 // pred_fallthru
      _
    // Predicated region
    $region18: #{tpu_custom_call.1} parent=1 // pred_check
      _
    $region19: #{tpu_custom_call.1} parent=1 // pred_check_branch
      %28 = sbr.rel (0) target = $region21
    $region20: #{tpu_custom_call.1} parent=1 // pred_region
      _
    $region21: #{tpu_custom_call.1} parent=1 // pred_fallthru
      _
    // Predicated region
    $region22: #{tpu_custom_call.1} parent=1 // pred_check
      _
    $region23: #{tpu_custom_call.1} parent=1 // pred_check_branch
      %30 = sbr.rel (0) target = $region25
    $region24: #{tpu_custom_call.1} parent=1 // pred_region
      %32 = vsyncadd [#allocation3], 0
      %s33 = sshll.u32 %s5, 4
      %s34 = int_to_ptr.hbm [resolvable:$true] %s33
      %s35 = sshll.u32 [#allocation2], 4
      %s36 = int_to_ptr.vmem [resolvable:$true] %s35
      %41 = dma.hbm_to_vmem [thread:$0]  %s34, 256, %s36, [#allocation3], 64, 64, 4
    $region25: #{tpu_custom_call.1} parent=1 // pred_fallthru
      _
    // Predicated region
    $region26: #{tpu_custom_call.1} parent=1 // pred_check
      _
    $region27: #{tpu_custom_call.1} parent=1 // pred_check_branch
      %43 = sbr.rel (0) target = $region29
    $region28: #{tpu_custom_call.1} parent=1 // pred_region
      _
    $region29: #{tpu_custom_call.1} parent=1 // pred_fallthru
      _
    // Predicated region
    $region30: #{tpu_custom_call.1} parent=1 // pred_check
      _
    $region31: #{tpu_custom_call.1} parent=1 // pred_check_branch
      %45 = sbr.rel (0) target = $region33
    $region32: #{tpu_custom_call.1} parent=1 // pred_region
      %47 = vsyncadd [#allocation6], 0
      %s48 = sshll.u32 %s7, 4
      %s49 = int_to_ptr.hbm [resolvable:$true] %s48
      %s50 = sshll.u32 [#allocation5], 4
      %s51 = int_to_ptr.vmem [resolvable:$true] %s50
      %56 = dma.hbm_to_vmem [thread:$0]  %s49, 256, %s51, [#allocation6], 64, 64, 4
    $region33: #{tpu_custom_call.1} parent=1 // pred_fallthru
      _
    // Predicated region
    $region34: #{tpu_custom_call.1} parent=1 // pred_check
      _
    $region35: #{tpu_custom_call.1} parent=1 // pred_check_branch
      %58 = sbr.rel (0) target = $region37
    $region36: #{tpu_custom_call.1} parent=1 // pred_region
      _
    $region37: #{tpu_custom_call.1} parent=1 // pred_fallthru
      _
    // Predicated region
    $region38: #{tpu_custom_call.1} parent=1 // pred_check
      _
    $region39: #{tpu_custom_call.1} parent=1 // pred_check_branch
      %60 = sbr.rel (0) target = $region41
    $region40: #{tpu_custom_call.1} parent=1 // pred_region
      %62 = vsyncadd [#allocation6], 0
      %s63 = sshll.u32 %s9, 4
      %s64 = int_to_ptr.hbm [resolvable:$true] %s63
      %s65 = sshll.u32 [#allocation7], 4
      %s66 = int_to_ptr.vmem [resolvable:$true] %s65
      %71 = dma.hbm_to_vmem [thread:$0]  %s64, 1024, %s66, [#allocation6], 64, 64, 4
    $region41: #{tpu_custom_call.1} parent=1 // pred_fallthru
      _
    // Predicated region
    $region42: #{tpu_custom_call.1} parent=1 // pred_check
      _
    $region43: #{tpu_custom_call.1} parent=1 // pred_check_branch
      %73 = sbr.rel (0) target = $region45
    $region44: #{tpu_custom_call.1} parent=1 // pred_region
      _
    $region45: #{tpu_custom_call.1} parent=1 // pred_fallthru
      _
    // Predicated region
    $region46: #{tpu_custom_call.1} parent=1 // pred_check
      _
    $region47: #{tpu_custom_call.1} parent=1 // pred_check_branch
      %75 = sbr.rel (0) target = $region49
    $region48: #{tpu_custom_call.1} parent=1 // pred_region
      %77 = dma.done [#allocation3], 256
    $region49: #{tpu_custom_call.1} parent=1 // pred_fallthru
      _
    // Predicated region
    $region50: #{tpu_custom_call.1} parent=1 // pred_check
      _
    $region51: #{tpu_custom_call.1} parent=1 // pred_check_branch
      %79 = sbr.rel (0) target = $region53
    $region52: #{tpu_custom_call.1} parent=1 // pred_region
      %81 = dma.done [#allocation6], 256
    $region53: #{tpu_custom_call.1} parent=1 // pred_fallthru
      _
    // Predicated region
    $region54: #{tpu_custom_call.1} parent=1 // pred_check
      _
    $region55: #{tpu_custom_call.1} parent=1 // pred_check_branch
      %83 = sbr.rel (0) target = $region57
    $region56: #{tpu_custom_call.1} parent=1 // pred_region
      %85 = dma.done [#allocation6], 1024
    $region57: #{tpu_custom_call.1} parent=1 // pred_fallthru
      _
    %v87 = vld [vmem:[%s1] sm:$0xf]
    %v88 = vld [vmem:[%s2] sm:$0xf]
    %v89 = vld [vmem:[%s2 + $0x4] sm:$0xf]
    %v90 = vld [vmem:[%s2 + $0x8] sm:$0xf]
    %v91 = vld [vmem:[%s2 + $0xc] sm:$0xf]
    %v92 = vld [vmem:[%s4] sm:$0xf]
    %v93 = vld [vmem:[%s4 + $0x4] sm:$0xf]
    %v94 = vld [vmem:[%s4 + $0x8] sm:$0xf]
    %v95 = vld [vmem:[%s4 + $0xc] sm:$0xf]
    %v96 = vld [vmem:[#allocation2] sm:$0xf]
    %v97 = vld [vmem:[#allocation2 + $0x4] sm:$0xf]
    %v98 = vld [vmem:[#allocation2 + $0x8] sm:$0xf]
    %v99 = vld [vmem:[#allocation2 + $0xc] sm:$0xf]
    %v100 = vld [vmem:[%s0] sm:$0xf]
    %v101 = vld [vmem:[%s0 + $0x4] sm:$0xf]
    %v102 = vld [vmem:[%s0 + $0x8] sm:$0xf]
    %v103 = vld [vmem:[%s0 + $0xc] sm:$0xf]
    %v104 = vld [vmem:[%s0 + $0x10] sm:$0xf]
    %v105 = vld [vmem:[%s0 + $0x14] sm:$0xf]
    %v106 = vld [vmem:[%s0 + $0x18] sm:$0xf]
    %v107 = vld [vmem:[%s0 + $0x1c] sm:$0xf]
    %v108 = vld [vmem:[%s3] sm:$0x1]
    %v110 = vperm.slane %v108, 0
    %v120 = vunpack.c.l.b16 %v100
    %v121 = vunpack.c.l.b16 %v101
    %v122 = vunpack.c.l.b16 %v102
    %v123 = vunpack.c.l.b16 %v103
    %v124 = vunpack.c.l.b16 %v104
    %v125 = vunpack.c.l.b16 %v105
    %v126 = vunpack.c.l.b16 %v106
    %v127 = vunpack.c.l.b16 %v107
    %v128 = vpack.c.b16 %v121, %v120
    %v129 = vpack.c.b16 %v123, %v122
    %v130 = vpack.c.b16 %v125, %v124
    %v131 = vpack.c.b16 %v127, %v126
    %vm132 = vcmask 64512
    %v134 = vsel %vm132, %v128, 0
    %v137 = vsel %vm132, %v129, 0
    %v140 = vsel %vm132, %v130, 0
    %v143 = vsel %vm132, %v131, 0
    %vm145 = vcmask 1043456
    %v147 = vsel %vm145, %v87, 0
    %149 = vmatpush.bf16.msra.mxu0 0
    %150 = vmatpush.bf16.msra.mxu0 0
    %151 = vmatpush.bf16.msra.mxu0 0
    %152 = vmatpush.bf16.msra.mxu0 0
    %153 = vmatpush.bf16.msra.mxu0 0
    %154 = vmatpush.bf16.msra.mxu0 0
    %155 = vmatpush.bf16.msra.mxu0 0
    %156 = vmatpush.bf16.msra.mxu0 %v147
    %157 = vmatmul.bf16.gmra.mxu0 %v134
    %v158 = vpop.f32.mrf.mxu0
    %v159 = vadd.f32 %v110, %v158
    %v160 = vpop.f32.mrf.mxu0
    %v161 = vadd.f32 %v110, %v160
    %162 = vmatmul.bf16.gmra.mxu0 %v137
    %v163 = vpop.f32.mrf.mxu0
    %v164 = vadd.f32 %v110, %v163
    %v165 = vpop.f32.mrf.mxu0
    %v166 = vadd.f32 %v110, %v165
    %167 = vmatmul.bf16.gmra.mxu0 %v140
    %v168 = vpop.f32.mrf.mxu0
    %v169 = vadd.f32 %v110, %v168
    %v170 = vpop.f32.mrf.mxu0
    %v171 = vadd.f32 %v110, %v170
    %172 = vmatmul.bf16.gmra.mxu0 %v143
    %v173 = vpop.f32.mrf.mxu0
    %v174 = vadd.f32 %v110, %v173
    %v175 = vpop.f32.mrf.mxu0
    %v176 = vadd.f32 %v110, %v175
    %177 = vdwg.mxu0
    %v178 = vld [vmem:[%s6] sm:$0x1]
    %v180 = vperm.slane %v178, 0
    %v182 = vlaneseq
    %v183 = vand.u32 %v182, 127
    %vm184 = vcmp.ge.s32.totalorder %v183, 64
    %vm185 = vcmp.lt.s32.totalorder %v183, 96
    %vm186 = vmand %vm184, %vm185
    %v187 = vsel %vm186, 1.0, 0.5
    %v188 = vsel %vm186, 0.0, 0.5
    %v193 = vunpack.c.l.b16 %v88
    %v194 = vunpack.c.l.b16 %v89
    %v195 = vunpack.c.l.b16 %v90
    %v196 = vunpack.c.l.b16 %v91
    %v197 = vpack.c.b16 %v194, %v193
    %v198 = vpack.c.b16 %v196, %v195
    %vm201 = vcmask 261120
    %v203 = vsel %vm201, 0, 0
    %205 = vmatpush.bf16.msra.mxu0 0
    %206 = vmatpush.bf16.msra.mxu0 0
    %207 = vmatpush.bf16.msra.mxu0 0
    %208 = vmatpush.bf16.msra.mxu0 0
    %209 = vmatpush.bf16.msra.mxu0 0
    %210 = vmatpush.bf16.msra.mxu0 0
    %211 = vmatpush.bf16.msra.mxu0 %v198
    %212 = vmatpush.bf16.msra.mxu0 %v197
    %213 = vmatmul.bf16.gmra.mxu0 %v203
    %v214 = vpop.f32.mrf.mxu0
    %v215 = vadd.f32 0.0, %v214
    %v216 = vpop.f32.mrf.mxu0
    %217 = vdwg.mxu0
    %v218 = vadd.f32 %v159, %v215
    %v219 = vmul.f32 %v218, %v187
    %v220 = vtanh.pop %v219
    %v221 = vmul.f32 %v187, %v220
    %v222 = vadd.f32 %v221, %v188
    %v223 = vmul.f32 %v222, 0.0
    %225 = vrot.lane.b32.xlu0 %v222, 64
    %v226 = vpop.permute.xlu0 %225
    %v228 = vmul.f32 %v222, %v226
    %230 = vrot.lane.b32.xlu0 %v228, 32
    %v231 = vpop.permute.xlu0 %230
    %v233 = vadd.f32 %v223, %v231
    %v234 = vtanh.pop %v233
    %236 = vrot.lane.b32.xlu0 %v234, 64
    %v237 = vpop.permute.xlu0 %236
    %v239 = vmul.f32 %v222, %v237
    %v240 = vtanh.pop %v239
    %v241 = vpack.c.bf16 %v240, %v240
    %v246 = vunpack.c.l.b16 %v96
    %v247 = vunpack.c.l.b16 %v97
    %v248 = vunpack.c.l.b16 %v98
    %v249 = vunpack.c.l.b16 %v99
    %v250 = vpack.c.b16 %v247, %v246
    %v251 = vpack.c.b16 %v249, %v248
    %254 = vmatpush.bf16.msra.mxu0 0
    %255 = vmatpush.bf16.msra.mxu0 0
    %256 = vmatpush.bf16.msra.mxu0 0
    %257 = vmatpush.bf16.msra.mxu0 0
    %258 = vmatpush.bf16.msra.mxu0 0
    %259 = vmatpush.bf16.msra.mxu0 0
    %260 = vmatpush.bf16.msra.mxu0 %v251
    %261 = vmatpush.bf16.msra.mxu0 %v250
    %262 = vmatmul.bf16.gmra.mxu0 %v203
    %v263 = vpop.f32.mrf.mxu0
    %v264 = vadd.f32 0.0, %v263
    %v265 = vpop.f32.mrf.mxu0
    %266 = vdwg.mxu0
    %268 = vrot.lane.b32.xlu0 %v241, 32
    %v269 = vpop.permute.xlu0 %268
    %v274 = vunpack.c.l.b16 %v92
    %v275 = vunpack.c.l.b16 %v93
    %v276 = vunpack.c.l.b16 %v94
    %v277 = vunpack.c.l.b16 %v95
    %v278 = vpack.c.b16 %v275, %v274
    %v279 = vpack.c.b16 %v277, %v276
    %v283 = vsel %vm201, %v269, 0
    %285 = vmatpush.bf16.msra.mxu0 0
    %286 = vmatpush.bf16.msra.mxu0 0
    %287 = vmatpush.bf16.msra.mxu0 0
    %288 = vmatpush.bf16.msra.mxu0 0
    %289 = vmatpush.bf16.msra.mxu0 0
    %290 = vmatpush.bf16.msra.mxu0 0
    %291 = vmatpush.bf16.msra.mxu0 %v279
    %292 = vmatpush.bf16.msra.mxu0 %v278
    %293 = vmatmul.bf16.gmra.mxu0 %v283
    %v294 = vpop.f32.mrf.mxu0
    %v295 = vadd.f32 %v264, %v294
    %v296 = vpop.f32.mrf.mxu0
    %297 = vdwg.mxu0
    %v298 = vadd.f32 %v295, %v180
    %v299 = vmul.f32 %v298, %v187
    %v300 = vtanh.pop %v299
    %v301 = vmul.f32 %v187, %v300
    %v302 = vadd.f32 %v301, %v188
    %v303 = vmul.f32 %v302, 0.0
    %305 = vrot.lane.b32.xlu0 %v302, 64
    %v306 = vpop.permute.xlu0 %305
    %v308 = vmul.f32 %v302, %v306
    %310 = vrot.lane.b32.xlu0 %v308, 32
    %v311 = vpop.permute.xlu0 %310
    %v313 = vadd.f32 %v303, %v311
    %v314 = vtanh.pop %v313
    %316 = vrot.lane.b32.xlu0 %v314, 64
    %v317 = vpop.permute.xlu0 %316
    %v319 = vmul.f32 %v302, %v317
    %v320 = vpack.c.bf16 %v239, %v239
    %322 = vrot.lane.b32.xlu0 %v320, 32
    %v323 = vpop.permute.xlu0 %322
    %v325 = vsel %vm201, %v323, 0
    %327 = vmatpush.bf16.msra.mxu0 0
    %328 = vmatpush.bf16.msra.mxu0 0
    %329 = vmatpush.bf16.msra.mxu0 0
    %330 = vmatpush.bf16.msra.mxu0 0
    %331 = vmatpush.bf16.msra.mxu0 0
    %332 = vmatpush.bf16.msra.mxu0 0
    %333 = vmatpush.bf16.msra.mxu0 %v198
    %334 = vmatpush.bf16.msra.mxu0 %v197
    %335 = vmatmul.bf16.gmra.mxu0 %v325
    %v336 = vpop.f32.mrf.mxu0
    %v337 = vadd.f32 0.0, %v336
    %v338 = vpop.f32.mrf.mxu0
    %339 = vdwg.mxu0
    %v340 = vadd.f32 %v161, %v337
    %v341 = vmul.f32 %v340, %v187
    %v342 = vtanh.pop %v341
    %v343 = vmul.f32 %v187, %v342
    %v344 = vadd.f32 %v343, %v188
    %v345 = vmul.f32 %v344, %v233
    %347 = vrot.lane.b32.xlu0 %v344, 64
    %v348 = vpop.permute.xlu0 %347
    %v350 = vmul.f32 %v344, %v348
    %352 = vrot.lane.b32.xlu0 %v350, 32
    %v353 = vpop.permute.xlu0 %352
    %v355 = vadd.f32 %v345, %v353
    %v356 = vtanh.pop %v355
    %358 = vrot.lane.b32.xlu0 %v356, 64
    %v359 = vpop.permute.xlu0 %358
    %v361 = vmul.f32 %v344, %v359
    %v362 = vtanh.pop %v361
    %v363 = vpack.c.bf16 %v362, %v362
    %v364 = vpack.c.bf16 %v319, %v319
    %366 = vrot.lane.b32.xlu0 %v364, 32
    %v367 = vpop.permute.xlu0 %366
    %v369 = vsel %vm201, %v367, 0
    %371 = vmatpush.bf16.msra.mxu0 0
    %372 = vmatpush.bf16.msra.mxu0 0
    %373 = vmatpush.bf16.msra.mxu0 0
    %374 = vmatpush.bf16.msra.mxu0 0
    %375 = vmatpush.bf16.msra.mxu0 0
    %376 = vmatpush.bf16.msra.mxu0 0
    %377 = vmatpush.bf16.msra.mxu0 %v251
    %378 = vmatpush.bf16.msra.mxu0 %v250
    %379 = vmatmul.bf16.gmra.mxu0 %v369
    %v380 = vpop.f32.mrf.mxu0
    %v381 = vadd.f32 0.0, %v380
    %v382 = vpop.f32.mrf.mxu0
    %383 = vdwg.mxu0
    %385 = vrot.lane.b32.xlu0 %v363, 32
    %v386 = vpop.permute.xlu0 %385
    %v388 = vsel %vm201, %v386, 0
    %390 = vmatpush.bf16.msra.mxu0 0
    %391 = vmatpush.bf16.msra.mxu0 0
    %392 = vmatpush.bf16.msra.mxu0 0
    %393 = vmatpush.bf16.msra.mxu0 0
    %394 = vmatpush.bf16.msra.mxu0 0
    %395 = vmatpush.bf16.msra.mxu0 0
    %396 = vmatpush.bf16.msra.mxu0 %v279
    %397 = vmatpush.bf16.msra.mxu0 %v278
    %398 = vmatmul.bf16.gmra.mxu0 %v388
    %v399 = vpop.f32.mrf.mxu0
    %v400 = vadd.f32 %v381, %v399
    %v401 = vpop.f32.mrf.mxu0
    %402 = vdwg.mxu0
    %v403 = vadd.f32 %v400, %v180
    %v404 = vmul.f32 %v403, %v187
    %v405 = vtanh.pop %v404
    %v406 = vmul.f32 %v187, %v405
    %v407 = vadd.f32 %v406, %v188
    %v408 = vmul.f32 %v407, %v313
    %410 = vrot.lane.b32.xlu0 %v407, 64
    %v411 = vpop.permute.xlu0 %410
    %v413 = vmul.f32 %v407, %v411
    %415 = vrot.lane.b32.xlu0 %v413, 32
    %v416 = vpop.permute.xlu0 %415
    %v418 = vadd.f32 %v408, %v416
    %v419 = vtanh.pop %v418
    %421 = vrot.lane.b32.xlu0 %v419, 64
    %v422 = vpop.permute.xlu0 %421
    %v424 = vmul.f32 %v407, %v422
    %v425 = vpack.c.bf16 %v361, %v361
    %427 = vrot.lane.b32.xlu0 %v425, 32
    %v428 = vpop.permute.xlu0 %427
    %v430 = vsel %vm201, %v428, 0
    %432 = vmatpush.bf16.msra.mxu0 0
    %433 = vmatpush.bf16.msra.mxu0 0
    %434 = vmatpush.bf16.msra.mxu0 0
    %435 = vmatpush.bf16.msra.mxu0 0
    %436 = vmatpush.bf16.msra.mxu0 0
    %437 = vmatpush.bf16.msra.mxu0 0
    %438 = vmatpush.bf16.msra.mxu0 %v198
    %439 = vmatpush.bf16.msra.mxu0 %v197
    %440 = vmatmul.bf16.gmra.mxu0 %v430
    %v441 = vpop.f32.mrf.mxu0
    %v442 = vadd.f32 0.0, %v441
    %v443 = vpop.f32.mrf.mxu0
    %444 = vdwg.mxu0
    %v445 = vadd.f32 %v164, %v442
    %v446 = vmul.f32 %v445, %v187
    %v447 = vtanh.pop %v446
    %v448 = vmul.f32 %v187, %v447
    %v449 = vadd.f32 %v448, %v188
    %v450 = vmul.f32 %v449, %v355
    %452 = vrot.lane.b32.xlu0 %v449, 64
    %v453 = vpop.permute.xlu0 %452
    %v455 = vmul.f32 %v449, %v453
    %457 = vrot.lane.b32.xlu0 %v455, 32
    %v458 = vpop.permute.xlu0 %457
    %v460 = vadd.f32 %v450, %v458
    %v461 = vtanh.pop %v460
    %463 = vrot.lane.b32.xlu0 %v461, 64
    %v464 = vpop.permute.xlu0 %463
    %v466 = vmul.f32 %v449, %v464
    %v467 = vtanh.pop %v466
    %v468 = vpack.c.bf16 %v467, %v467
    %v469 = vpack.c.bf16 %v424, %v424
    %471 = vrot.lane.b32.xlu0 %v469, 32
    %v472 = vpop.permute.xlu0 %471
    %v474 = vsel %vm201, %v472, 0
    %476 = vmatpush.bf16.msra.mxu0 0
    %477 = vmatpush.bf16.msra.mxu0 0
    %478 = vmatpush.bf16.msra.mxu0 0
    %479 = vmatpush.bf16.msra.mxu0 0
    %480 = vmatpush.bf16.msra.mxu0 0
    %481 = vmatpush.bf16.msra.mxu0 0
    %482 = vmatpush.bf16.msra.mxu0 %v251
    %483 = vmatpush.bf16.msra.mxu0 %v250
    %484 = vmatmul.bf16.gmra.mxu0 %v474
    %v485 = vpop.f32.mrf.mxu0
    %v486 = vadd.f32 0.0, %v485
    %v487 = vpop.f32.mrf.mxu0
    %488 = vdwg.mxu0
    %490 = vrot.lane.b32.xlu0 %v468, 32
    %v491 = vpop.permute.xlu0 %490
    %v493 = vsel %vm201, %v491, 0
    %495 = vmatpush.bf16.msra.mxu0 0
    %496 = vmatpush.bf16.msra.mxu0 0
    %497 = vmatpush.bf16.msra.mxu0 0
    %498 = vmatpush.bf16.msra.mxu0 0
    %499 = vmatpush.bf16.msra.mxu0 0
    %500 = vmatpush.bf16.msra.mxu0 0
    %501 = vmatpush.bf16.msra.mxu0 %v279
    %502 = vmatpush.bf16.msra.mxu0 %v278
    %503 = vmatmul.bf16.gmra.mxu0 %v493
    %v504 = vpop.f32.mrf.mxu0
    %v505 = vadd.f32 %v486, %v504
    %v506 = vpop.f32.mrf.mxu0
    %507 = vdwg.mxu0
    %v508 = vadd.f32 %v505, %v180
    %v509 = vmul.f32 %v508, %v187
    %v510 = vtanh.pop %v509
    %v511 = vmul.f32 %v187, %v510
    %v512 = vadd.f32 %v511, %v188
    %v513 = vmul.f32 %v512, %v418
    %515 = vrot.lane.b32.xlu0 %v512, 64
    %v516 = vpop.permute.xlu0 %515
    %v518 = vmul.f32 %v512, %v516
    %520 = vrot.lane.b32.xlu0 %v518, 32
    %v521 = vpop.permute.xlu0 %520
    %v523 = vadd.f32 %v513, %v521
    %v524 = vtanh.pop %v523
    %526 = vrot.lane.b32.xlu0 %v524, 64
    %v527 = vpop.permute.xlu0 %526
    %v529 = vmul.f32 %v512, %v527
    %v530 = vpack.c.bf16 %v466, %v466
    %532 = vrot.lane.b32.xlu0 %v530, 32
    %v533 = vpop.permute.xlu0 %532
    %v535 = vsel %vm201, %v533, 0
    %537 = vmatpush.bf16.msra.mxu0 0
    %538 = vmatpush.bf16.msra.mxu0 0
    %539 = vmatpush.bf16.msra.mxu0 0
    %540 = vmatpush.bf16.msra.mxu0 0
    %541 = vmatpush.bf16.msra.mxu0 0
    %542 = vmatpush.bf16.msra.mxu0 0
    %543 = vmatpush.bf16.msra.mxu0 %v198
    %544 = vmatpush.bf16.msra.mxu0 %v197
    %545 = vmatmul.bf16.gmra.mxu0 %v535
    %v546 = vpop.f32.mrf.mxu0
    %v547 = vadd.f32 0.0, %v546
    %v548 = vpop.f32.mrf.mxu0
    %549 = vdwg.mxu0
    %v550 = vadd.f32 %v166, %v547
    %v551 = vmul.f32 %v550, %v187
    %v552 = vtanh.pop %v551
    %v553 = vmul.f32 %v187, %v552
    %v554 = vadd.f32 %v553, %v188
    %v555 = vmul.f32 %v554, %v460
    %557 = vrot.lane.b32.xlu0 %v554, 64
    %v558 = vpop.permute.xlu0 %557
    %v560 = vmul.f32 %v554, %v558
    %562 = vrot.lane.b32.xlu0 %v560, 32
    %v563 = vpop.permute.xlu0 %562
    %v565 = vadd.f32 %v555, %v563
    %v566 = vtanh.pop %v565
    %568 = vrot.lane.b32.xlu0 %v566, 64
    %v569 = vpop.permute.xlu0 %568
    %v571 = vmul.f32 %v554, %v569
    %v572 = vtanh.pop %v571
    %v573 = vpack.c.bf16 %v572, %v572
    %v574 = vpack.c.bf16 %v529, %v529
    %576 = vrot.lane.b32.xlu0 %v574, 32
    %v577 = vpop.permute.xlu0 %576
    %v579 = vsel %vm201, %v577, 0
    %581 = vmatpush.bf16.msra.mxu0 0
    %582 = vmatpush.bf16.msra.mxu0 0
    %583 = vmatpush.bf16.msra.mxu0 0
    %584 = vmatpush.bf16.msra.mxu0 0
    %585 = vmatpush.bf16.msra.mxu0 0
    %586 = vmatpush.bf16.msra.mxu0 0
    %587 = vmatpush.bf16.msra.mxu0 %v251
    %588 = vmatpush.bf16.msra.mxu0 %v250
    %589 = vmatmul.bf16.gmra.mxu0 %v579
    %v590 = vpop.f32.mrf.mxu0
    %v591 = vadd.f32 0.0, %v590
    %v592 = vpop.f32.mrf.mxu0
    %593 = vdwg.mxu0
    %595 = vrot.lane.b32.xlu0 %v573, 32
    %v596 = vpop.permute.xlu0 %595
    %v598 = vsel %vm201, %v596, 0
    %600 = vmatpush.bf16.msra.mxu0 0
    %601 = vmatpush.bf16.msra.mxu0 0
    %602 = vmatpush.bf16.msra.mxu0 0
    %603 = vmatpush.bf16.msra.mxu0 0
    %604 = vmatpush.bf16.msra.mxu0 0
    %605 = vmatpush.bf16.msra.mxu0 0
    %606 = vmatpush.bf16.msra.mxu0 %v279
    %607 = vmatpush.bf16.msra.mxu0 %v278
    %608 = vmatmul.bf16.gmra.mxu0 %v598
    %v609 = vpop.f32.mrf.mxu0
    %v610 = vadd.f32 %v591, %v609
    %v611 = vpop.f32.mrf.mxu0
    %612 = vdwg.mxu0
    %v613 = vadd.f32 %v610, %v180
    %v614 = vmul.f32 %v613, %v187
    %v615 = vtanh.pop %v614
    %v616 = vmul.f32 %v187, %v615
    %v617 = vadd.f32 %v616, %v188
    %v618 = vmul.f32 %v617, %v523
    %620 = vrot.lane.b32.xlu0 %v617, 64
    %v621 = vpop.permute.xlu0 %620
    %v623 = vmul.f32 %v617, %v621
    %625 = vrot.lane.b32.xlu0 %v623, 32
    %v626 = vpop.permute.xlu0 %625
    %v628 = vadd.f32 %v618, %v626
    %v629 = vtanh.pop %v628
    %631 = vrot.lane.b32.xlu0 %v629, 64
    %v632 = vpop.permute.xlu0 %631
    %v634 = vmul.f32 %v617, %v632
    %v635 = vpack.c.bf16 %v571, %v571
    %637 = vrot.lane.b32.xlu0 %v635, 32
    %v638 = vpop.permute.xlu0 %637
    %v640 = vsel %vm201, %v638, 0
    %642 = vmatpush.bf16.msra.mxu0 0
    %643 = vmatpush.bf16.msra.mxu0 0
    %644 = vmatpush.bf16.msra.mxu0 0
    %645 = vmatpush.bf16.msra.mxu0 0
    %646 = vmatpush.bf16.msra.mxu0 0
    %647 = vmatpush.bf16.msra.mxu0 0
    %648 = vmatpush.bf16.msra.mxu0 %v198
    %649 = vmatpush.bf16.msra.mxu0 %v197
    %650 = vmatmul.bf16.gmra.mxu0 %v640
    %v651 = vpop.f32.mrf.mxu0
    %v652 = vadd.f32 0.0, %v651
    %v653 = vpop.f32.mrf.mxu0
    %654 = vdwg.mxu0
    %v655 = vadd.f32 %v169, %v652
    %v656 = vmul.f32 %v655, %v187
    %v657 = vtanh.pop %v656
    %v658 = vmul.f32 %v187, %v657
    %v659 = vadd.f32 %v658, %v188
    %v660 = vmul.f32 %v659, %v565
    %662 = vrot.lane.b32.xlu0 %v659, 64
    %v663 = vpop.permute.xlu0 %662
    %v665 = vmul.f32 %v659, %v663
    %667 = vrot.lane.b32.xlu0 %v665, 32
    %v668 = vpop.permute.xlu0 %667
    %v670 = vadd.f32 %v660, %v668
    %v671 = vtanh.pop %v670
    %673 = vrot.lane.b32.xlu0 %v671, 64
    %v674 = vpop.permute.xlu0 %673
    %v676 = vmul.f32 %v659, %v674
    %v677 = vtanh.pop %v676
    %v678 = vpack.c.bf16 %v677, %v677
    %v679 = vpack.c.bf16 %v634, %v634
    %681 = vrot.lane.b32.xlu0 %v679, 32
    %v682 = vpop.permute.xlu0 %681
    %v684 = vsel %vm201, %v682, 0
    %686 = vmatpush.bf16.msra.mxu0 0
    %687 = vmatpush.bf16.msra.mxu0 0
    %688 = vmatpush.bf16.msra.mxu0 0
    %689 = vmatpush.bf16.msra.mxu0 0
    %690 = vmatpush.bf16.msra.mxu0 0
    %691 = vmatpush.bf16.msra.mxu0 0
    %692 = vmatpush.bf16.msra.mxu0 %v251
    %693 = vmatpush.bf16.msra.mxu0 %v250
    %694 = vmatmul.bf16.gmra.mxu0 %v684
    %v695 = vpop.f32.mrf.mxu0
    %v696 = vadd.f32 0.0, %v695
    %v697 = vpop.f32.mrf.mxu0
    %698 = vdwg.mxu0
    %700 = vrot.lane.b32.xlu0 %v678, 32
    %v701 = vpop.permute.xlu0 %700
    %v703 = vsel %vm201, %v701, 0
    %705 = vmatpush.bf16.msra.mxu0 0
    %706 = vmatpush.bf16.msra.mxu0 0
    %707 = vmatpush.bf16.msra.mxu0 0
    %708 = vmatpush.bf16.msra.mxu0 0
    %709 = vmatpush.bf16.msra.mxu0 0
    %710 = vmatpush.bf16.msra.mxu0 0
    %711 = vmatpush.bf16.msra.mxu0 %v279
    %712 = vmatpush.bf16.msra.mxu0 %v278
    %713 = vmatmul.bf16.gmra.mxu0 %v703
    %v714 = vpop.f32.mrf.mxu0
    %v715 = vadd.f32 %v696, %v714
    %v716 = vpop.f32.mrf.mxu0
    %717 = vdwg.mxu0
    %v718 = vadd.f32 %v715, %v180
    %v719 = vmul.f32 %v718, %v187
    %v720 = vtanh.pop %v719
    %v721 = vmul.f32 %v187, %v720
    %v722 = vadd.f32 %v721, %v188
    %v723 = vmul.f32 %v722, %v628
    %725 = vrot.lane.b32.xlu0 %v722, 64
    %v726 = vpop.permute.xlu0 %725
    %v728 = vmul.f32 %v722, %v726
    %730 = vrot.lane.b32.xlu0 %v728, 32
    %v731 = vpop.permute.xlu0 %730
    %v733 = vadd.f32 %v723, %v731
    %v734 = vtanh.pop %v733
    %736 = vrot.lane.b32.xlu0 %v734, 64
    %v737 = vpop.permute.xlu0 %736
    %v739 = vmul.f32 %v722, %v737
    %v740 = vpack.c.bf16 %v676, %v676
    %742 = vrot.lane.b32.xlu0 %v740, 32
    %v743 = vpop.permute.xlu0 %742
    %v745 = vsel %vm201, %v743, 0
    %747 = vmatpush.bf16.msra.mxu0 0
    %748 = vmatpush.bf16.msra.mxu0 0
    %749 = vmatpush.bf16.msra.mxu0 0
    %750 = vmatpush.bf16.msra.mxu0 0
    %751 = vmatpush.bf16.msra.mxu0 0
    %752 = vmatpush.bf16.msra.mxu0 0
    %753 = vmatpush.bf16.msra.mxu0 %v198
    %754 = vmatpush.bf16.msra.mxu0 %v197
    %755 = vmatmul.bf16.gmra.mxu0 %v745
    %v756 = vpop.f32.mrf.mxu0
    %v757 = vadd.f32 0.0, %v756
    %v758 = vpop.f32.mrf.mxu0
    %759 = vdwg.mxu0
    %v760 = vadd.f32 %v171, %v757
    %v761 = vmul.f32 %v760, %v187
    %v762 = vtanh.pop %v761
    %v763 = vmul.f32 %v187, %v762
    %v764 = vadd.f32 %v763, %v188
    %v765 = vmul.f32 %v764, %v670
    %767 = vrot.lane.b32.xlu0 %v764, 64
    %v768 = vpop.permute.xlu0 %767
    %v770 = vmul.f32 %v764, %v768
    %772 = vrot.lane.b32.xlu0 %v770, 32
    %v773 = vpop.permute.xlu0 %772
    %v775 = vadd.f32 %v765, %v773
    %v776 = vtanh.pop %v775
    %778 = vrot.lane.b32.xlu0 %v776, 64
    %v779 = vpop.permute.xlu0 %778
    %v781 = vmul.f32 %v764, %v779
    %v782 = vtanh.pop %v781
    %v783 = vpack.c.bf16 %v782, %v782
    %v784 = vpack.c.bf16 %v739, %v739
    %786 = vrot.lane.b32.xlu0 %v784, 32
    %v787 = vpop.permute.xlu0 %786
    %v789 = vsel %vm201, %v787, 0
    %791 = vmatpush.bf16.msra.mxu0 0
    %792 = vmatpush.bf16.msra.mxu0 0
    %793 = vmatpush.bf16.msra.mxu0 0
    %794 = vmatpush.bf16.msra.mxu0 0
    %795 = vmatpush.bf16.msra.mxu0 0
    %796 = vmatpush.bf16.msra.mxu0 0
    %797 = vmatpush.bf16.msra.mxu0 %v251
    %798 = vmatpush.bf16.msra.mxu0 %v250
    %799 = vmatmul.bf16.gmra.mxu0 %v789
    %v800 = vpop.f32.mrf.mxu0
    %v801 = vadd.f32 0.0, %v800
    %v802 = vpop.f32.mrf.mxu0
    %803 = vdwg.mxu0
    %805 = vrot.lane.b32.xlu0 %v783, 32
    %v806 = vpop.permute.xlu0 %805
    %v808 = vsel %vm201, %v806, 0
    %810 = vmatpush.bf16.msra.mxu0 0
    %811 = vmatpush.bf16.msra.mxu0 0
    %812 = vmatpush.bf16.msra.mxu0 0
    %813 = vmatpush.bf16.msra.mxu0 0
    %814 = vmatpush.bf16.msra.mxu0 0
    %815 = vmatpush.bf16.msra.mxu0 0
    %816 = vmatpush.bf16.msra.mxu0 %v279
    %817 = vmatpush.bf16.msra.mxu0 %v278
    %818 = vmatmul.bf16.gmra.mxu0 %v808
    %v819 = vpop.f32.mrf.mxu0
    %v820 = vadd.f32 %v801, %v819
    %v821 = vpop.f32.mrf.mxu0
    %822 = vdwg.mxu0
    %v823 = vadd.f32 %v820, %v180
    %v824 = vmul.f32 %v823, %v187
    %v825 = vtanh.pop %v824
    %v826 = vmul.f32 %v187, %v825
    %v827 = vadd.f32 %v826, %v188
    %v828 = vmul.f32 %v827, %v733
    %830 = vrot.lane.b32.xlu0 %v827, 64
    %v831 = vpop.permute.xlu0 %830
    %v833 = vmul.f32 %v827, %v831
    %835 = vrot.lane.b32.xlu0 %v833, 32
    %v836 = vpop.permute.xlu0 %835
    %v838 = vadd.f32 %v828, %v836
    %v839 = vtanh.pop %v838
    %841 = vrot.lane.b32.xlu0 %v839, 64
    %v842 = vpop.permute.xlu0 %841
    %v844 = vmul.f32 %v827, %v842
    %v845 = vpack.c.bf16 %v781, %v781
    %847 = vrot.lane.b32.xlu0 %v845, 32
    %v848 = vpop.permute.xlu0 %847
    %v850 = vsel %vm201, %v848, 0
    %852 = vmatpush.bf16.msra.mxu0 0
    %853 = vmatpush.bf16.msra.mxu0 0
    %854 = vmatpush.bf16.msra.mxu0 0
    %855 = vmatpush.bf16.msra.mxu0 0
    %856 = vmatpush.bf16.msra.mxu0 0
    %857 = vmatpush.bf16.msra.mxu0 0
    %858 = vmatpush.bf16.msra.mxu0 %v198
    %859 = vmatpush.bf16.msra.mxu0 %v197
    %860 = vmatmul.bf16.gmra.mxu0 %v850
    %v861 = vpop.f32.mrf.mxu0
    %v862 = vadd.f32 0.0, %v861
    %v863 = vpop.f32.mrf.mxu0
    %864 = vdwg.mxu0
    %v865 = vadd.f32 %v174, %v862
    %v866 = vmul.f32 %v865, %v187
    %v867 = vtanh.pop %v866
    %v868 = vmul.f32 %v187, %v867
    %v869 = vadd.f32 %v868, %v188
    %v870 = vmul.f32 %v869, %v775
    %872 = vrot.lane.b32.xlu0 %v869, 64
    %v873 = vpop.permute.xlu0 %872
    %v875 = vmul.f32 %v869, %v873
    %877 = vrot.lane.b32.xlu0 %v875, 32
    %v878 = vpop.permute.xlu0 %877
    %v880 = vadd.f32 %v870, %v878
    %v881 = vtanh.pop %v880
    %883 = vrot.lane.b32.xlu0 %v881, 64
    %v884 = vpop.permute.xlu0 %883
    %v886 = vmul.f32 %v869, %v884
    %v887 = vtanh.pop %v886
    %v888 = vpack.c.bf16 %v887, %v887
    %v889 = vpack.c.bf16 %v844, %v844
    %891 = vrot.lane.b32.xlu0 %v889, 32
    %v892 = vpop.permute.xlu0 %891
    %v894 = vsel %vm201, %v892, 0
    %896 = vmatpush.bf16.msra.mxu0 0
    %897 = vmatpush.bf16.msra.mxu0 0
    %898 = vmatpush.bf16.msra.mxu0 0
    %899 = vmatpush.bf16.msra.mxu0 0
    %900 = vmatpush.bf16.msra.mxu0 0
    %901 = vmatpush.bf16.msra.mxu0 0
    %902 = vmatpush.bf16.msra.mxu0 %v251
    %903 = vmatpush.bf16.msra.mxu0 %v250
    %904 = vmatmul.bf16.gmra.mxu0 %v894
    %v905 = vpop.f32.mrf.mxu0
    %v906 = vadd.f32 0.0, %v905
    %v907 = vpop.f32.mrf.mxu0
    %908 = vdwg.mxu0
    %910 = vrot.lane.b32.xlu0 %v888, 32
    %v911 = vpop.permute.xlu0 %910
    %v913 = vsel %vm201, %v911, 0
    %915 = vmatpush.bf16.msra.mxu0 0
    %916 = vmatpush.bf16.msra.mxu0 0
    %917 = vmatpush.bf16.msra.mxu0 0
    %918 = vmatpush.bf16.msra.mxu0 0
    %919 = vmatpush.bf16.msra.mxu0 0
    %920 = vmatpush.bf16.msra.mxu0 0
    %921 = vmatpush.bf16.msra.mxu0 %v279
    %922 = vmatpush.bf16.msra.mxu0 %v278
    %923 = vmatmul.bf16.gmra.mxu0 %v913
    %v924 = vpop.f32.mrf.mxu0
    %v925 = vadd.f32 %v906, %v924
    %v926 = vpop.f32.mrf.mxu0
    %927 = vdwg.mxu0
    %v928 = vadd.f32 %v925, %v180
    %v929 = vmul.f32 %v928, %v187
    %v930 = vtanh.pop %v929
    %v931 = vmul.f32 %v187, %v930
    %v932 = vadd.f32 %v931, %v188
    %v933 = vmul.f32 %v932, %v838
    %935 = vrot.lane.b32.xlu0 %v932, 64
    %v936 = vpop.permute.xlu0 %935
    %v938 = vmul.f32 %v932, %v936
    %940 = vrot.lane.b32.xlu0 %v938, 32
    %v941 = vpop.permute.xlu0 %940
    %v943 = vadd.f32 %v933, %v941
    %v944 = vtanh.pop %v943
    %946 = vrot.lane.b32.xlu0 %v944, 64
    %v947 = vpop.permute.xlu0 %946
    %v949 = vmul.f32 %v932, %v947
    %v950 = vpack.c.bf16 %v886, %v886
    %952 = vrot.lane.b32.xlu0 %v950, 32
    %v953 = vpop.permute.xlu0 %952
    %v955 = vsel %vm201, %v953, 0
    %957 = vmatpush.bf16.msra.mxu0 0
    %958 = vmatpush.bf16.msra.mxu0 0
    %959 = vmatpush.bf16.msra.mxu0 0
    %960 = vmatpush.bf16.msra.mxu0 0
    %961 = vmatpush.bf16.msra.mxu0 0
    %962 = vmatpush.bf16.msra.mxu0 0
    %963 = vmatpush.bf16.msra.mxu0 %v198
    %964 = vmatpush.bf16.msra.mxu0 %v197
    %965 = vmatmul.bf16.gmra.mxu0 %v955
    %v966 = vpop.f32.mrf.mxu0
    %v967 = vadd.f32 0.0, %v966
    %v968 = vpop.f32.mrf.mxu0
    %969 = vdwg.mxu0
    %v970 = vadd.f32 %v176, %v967
    %v971 = vmul.f32 %v970, %v187
    %v972 = vtanh.pop %v971
    %v973 = vmul.f32 %v187, %v972
    %v974 = vadd.f32 %v973, %v188
    %v975 = vmul.f32 %v974, %v880
    %977 = vrot.lane.b32.xlu0 %v974, 64
    %v978 = vpop.permute.xlu0 %977
    %v980 = vmul.f32 %v974, %v978
    %982 = vrot.lane.b32.xlu0 %v980, 32
    %v983 = vpop.permute.xlu0 %982
    %v985 = vadd.f32 %v975, %v983
    %v986 = vtanh.pop %v985
    %988 = vrot.lane.b32.xlu0 %v986, 64
    %v989 = vpop.permute.xlu0 %988
    %v991 = vmul.f32 %v974, %v989
    %v992 = vtanh.pop %v991
    %v993 = vpack.c.bf16 %v992, %v992
    %v994 = vpack.c.bf16 %v949, %v949
    %996 = vrot.lane.b32.xlu0 %v994, 32
    %v997 = vpop.permute.xlu0 %996
    %v999 = vsel %vm201, %v997, 0
    %1001 = vmatpush.bf16.msra.mxu0 0
    %1002 = vmatpush.bf16.msra.mxu0 0
    %1003 = vmatpush.bf16.msra.mxu0 0
    %1004 = vmatpush.bf16.msra.mxu0 0
    %1005 = vmatpush.bf16.msra.mxu0 0
    %1006 = vmatpush.bf16.msra.mxu0 0
    %1007 = vmatpush.bf16.msra.mxu0 %v251
    %1008 = vmatpush.bf16.msra.mxu0 %v250
    %1009 = vmatmul.bf16.gmra.mxu0 %v999
    %v1010 = vpop.f32.mrf.mxu0
    %v1011 = vadd.f32 0.0, %v1010
    %v1012 = vpop.f32.mrf.mxu0
    %1013 = vdwg.mxu0
    %1015 = vrot.lane.b32.xlu0 %v993, 32
    %v1016 = vpop.permute.xlu0 %1015
    %v1018 = vsel %vm201, %v1016, 0
    %1020 = vmatpush.bf16.msra.mxu0 0
    %1021 = vmatpush.bf16.msra.mxu0 0
    %1022 = vmatpush.bf16.msra.mxu0 0
    %1023 = vmatpush.bf16.msra.mxu0 0
    %1024 = vmatpush.bf16.msra.mxu0 0
    %1025 = vmatpush.bf16.msra.mxu0 0
    %1026 = vmatpush.bf16.msra.mxu0 %v279
    %1027 = vmatpush.bf16.msra.mxu0 %v278
    %1028 = vmatmul.bf16.gmra.mxu0 %v1018
    %v1029 = vpop.f32.mrf.mxu0
    %v1030 = vadd.f32 %v1011, %v1029
    %v1031 = vpop.f32.mrf.mxu0
    %1032 = vdwg.mxu0
    %v1033 = vadd.f32 %v1030, %v180
    %v1034 = vmul.f32 %v1033, %v187
    %v1035 = vtanh.pop %v1034
    %v1036 = vmul.f32 %v187, %v1035
    %v1037 = vadd.f32 %v1036, %v188
    %v1038 = vmul.f32 %v1037, %v943
    %1040 = vrot.lane.b32.xlu0 %v1037, 64
    %v1041 = vpop.permute.xlu0 %1040
    %v1043 = vmul.f32 %v1037, %v1041
    %1045 = vrot.lane.b32.xlu0 %v1043, 32
    %v1046 = vpop.permute.xlu0 %1045
    %v1048 = vadd.f32 %v1038, %v1046
    %v1049 = vtanh.pop %v1048
    %1051 = vrot.lane.b32.xlu0 %v1049, 64
    %v1052 = vpop.permute.xlu0 %1051
    %v1054 = vmul.f32 %v1037, %v1052
    %v1055 = vtanh.pop %v1054
    %v1056 = vpack.c.bf16 %v1055, %v1055
    %v1057 = vld [vmem:[#allocation5] sm:$0xf]
    %v1058 = vld [vmem:[#allocation5 + $0x4] sm:$0xf]
    %v1059 = vld [vmem:[#allocation5 + $0x8] sm:$0xf]
    %v1060 = vld [vmem:[#allocation5 + $0xc] sm:$0xf]
    %v1061 = vld [vmem:[%s8] sm:$0x1]
    %v1063 = vperm.slane %v1061, 0
    %1066 = vrot.lane.b32.xlu0 %v1056, 32
    %v1067 = vpop.permute.xlu0 %1066
    %v1072 = vunpack.c.l.b16 %v1057
    %v1073 = vunpack.c.l.b16 %v1058
    %v1074 = vunpack.c.l.b16 %v1059
    %v1075 = vunpack.c.l.b16 %v1060
    %v1076 = vpack.c.b16 %v1073, %v1072
    %v1077 = vpack.c.b16 %v1075, %v1074
    %v1081 = vsel %vm201, %v1067, 0
    %1083 = vmatpush.bf16.msra.mxu0 0
    %1084 = vmatpush.bf16.msra.mxu0 0
    %1085 = vmatpush.bf16.msra.mxu0 0
    %1086 = vmatpush.bf16.msra.mxu0 0
    %1087 = vmatpush.bf16.msra.mxu0 0
    %1088 = vmatpush.bf16.msra.mxu0 0
    %1089 = vmatpush.bf16.msra.mxu0 %v1077
    %1090 = vmatpush.bf16.msra.mxu0 %v1076
    %1091 = vmatmul.bf16.gmra.mxu0 %v1081
    %v1092 = vpop.f32.mrf.mxu0
    %v1093 = vadd.f32 %v1063, %v1092
    %v1094 = vpop.f32.mrf.mxu0
    %1095 = vdwg.mxu0
    %v1096 = vmax.f32 %v1093, 0.0
    %v1097 = vpack.c.bf16 %v1096, %v1096
    %v1098 = vld [vmem:[#allocation7] sm:$0xf]
    %v1099 = vld [vmem:[#allocation7 + $0x4] sm:$0xf]
    %v1100 = vld [vmem:[#allocation7 + $0x8] sm:$0xf]
    %v1101 = vld [vmem:[#allocation7 + $0xc] sm:$0xf]
    %v1102 = vld [vmem:[#allocation7 + $0x10] sm:$0xf]
    %v1103 = vld [vmem:[#allocation7 + $0x14] sm:$0xf]
    %v1104 = vld [vmem:[#allocation7 + $0x18] sm:$0xf]
    %v1105 = vld [vmem:[#allocation7 + $0x1c] sm:$0xf]
    %v1106 = vld [vmem:[#allocation7 + $0x20] sm:$0xf]
    %v1107 = vld [vmem:[#allocation7 + $0x24] sm:$0xf]
    %v1108 = vld [vmem:[#allocation7 + $0x28] sm:$0xf]
    %v1109 = vld [vmem:[#allocation7 + $0x2c] sm:$0xf]
    %v1110 = vld [vmem:[#allocation7 + $0x30] sm:$0xf]
    %v1111 = vld [vmem:[#allocation7 + $0x34] sm:$0xf]
    %v1112 = vld [vmem:[#allocation7 + $0x38] sm:$0xf]
    %v1113 = vld [vmem:[#allocation7 + $0x3c] sm:$0xf]
    %v1114 = vld [vmem:[%s10] sm:$0x1]
    %v1116 = vperm.slane %v1114, 0
    %v1134 = vunpack.c.l.b16 %v1098
    %v1135 = vunpack.c.l.b16 %v1099
    %v1136 = vunpack.c.l.b16 %v1100
    %v1137 = vunpack.c.l.b16 %v1101
    %v1138 = vunpack.c.l.b16 %v1102
    %v1139 = vunpack.c.l.b16 %v1103
    %v1140 = vunpack.c.l.b16 %v1104
    %v1141 = vunpack.c.l.b16 %v1105
    %v1142 = vunpack.c.l.b16 %v1106
    %v1143 = vunpack.c.l.b16 %v1107
    %v1144 = vunpack.c.l.b16 %v1108
    %v1145 = vunpack.c.l.b16 %v1109
    %v1146 = vunpack.c.l.b16 %v1110
    %v1147 = vunpack.c.l.b16 %v1111
    %v1148 = vunpack.c.l.b16 %v1112
    %v1149 = vunpack.c.l.b16 %v1113
    %v1150 = vpack.c.b16 %v1135, %v1134
    %v1151 = vpack.c.b16 %v1137, %v1136
    %v1152 = vpack.c.b16 %v1139, %v1138
    %v1153 = vpack.c.b16 %v1141, %v1140
    %v1154 = vpack.c.b16 %v1143, %v1142
    %v1155 = vpack.c.b16 %v1145, %v1144
    %v1156 = vpack.c.b16 %v1147, %v1146
    %v1157 = vpack.c.b16 %v1149, %v1148
    %1166 = vmatpush.bf16.msra.mxu0 %v1157
    %1167 = vmatpush.bf16.msra.mxu0 %v1156
    %1168 = vmatpush.bf16.msra.mxu0 %v1155
    %1169 = vmatpush.bf16.msra.mxu0 %v1154
    %1170 = vmatpush.bf16.msra.mxu0 %v1153
    %1171 = vmatpush.bf16.msra.mxu0 %v1152
    %1172 = vmatpush.bf16.msra.mxu0 %v1151
    %1173 = vmatpush.bf16.msra.mxu0 %v1150
    %1174 = vmatmul.bf16.gmra.mxu0 %v1097
    %v1175 = vpop.f32.mrf.mxu0
    %v1176 = vadd.f32 %v1116, %v1175
    %v1177 = vpop.f32.mrf.mxu0
    %1178 = vdwg.mxu0
    %1179 = vst [vmem:[#allocation8] sm:$0xff] %v1176
    // Predicated region
    $region58: #{tpu_custom_call.1} parent=1 // pred_check
      _
    $region59: #{tpu_custom_call.1} parent=1 // pred_check_branch
      %1181 = sbr.rel (0) target = $region61
    $region60: #{tpu_custom_call.1} parent=1 // pred_region
      %1183 = vsyncadd [#allocation4], 0
      %s1185 = sshll.u32 [#allocation8], 4
      %s1186 = int_to_ptr.vmem [resolvable:$true] %s1185
      %s1187 = sshll.u32 %s11, 4
      %s1188 = int_to_ptr.hbm [resolvable:$true] %s1187
      %1190 = dma.vmem_to_hbm [thread:$0]  %s1186, 128, %s1188, [#allocation4]
    $region61: #{tpu_custom_call.1} parent=1 // pred_fallthru
      _
    // Predicated region
    $region62: #{tpu_custom_call.1} parent=1 // pred_check
      _
    $region63: #{tpu_custom_call.1} parent=1 // pred_check_branch
      %1192 = sbr.rel (0) target = $region65
    $region64: #{tpu_custom_call.1} parent=1 // pred_region
      %1194 = dma.done [#allocation4], 128
    $region65: #{tpu_custom_call.1} parent=1 // pred_fallthru
      _
    %1195 = vsyncpa [#allocation3], 1
    %1196 = vsyncpa [#allocation6], 1
    %1197 = vsyncpa [#allocation4], 1

</llo_original>
